<compile_context>
chip_gen: v5e
topology: v5e:2x2
jax: 0.10.0
libtpu: 0.0.40
codegen_flags: <defaults>
</compile_context>

<pallas_src>
import functools

import numpy as np
import jax
import jax.numpy as jnp
from jax.experimental import pallas as pl
from jax.experimental.pallas import tpu as pltpu

_VMEM_LIMIT = 32 * 1024 * 1024  # safe scoped-VMEM cap for v5e/v6e/v7x
_TM_CAP = 512                   # M-tile cap (keeps double-buffered tiles well under VMEM on v7x)
_TN_CAP = 512                   # N-tile cap (multiple of 128 -> lane-dense stores)


# ----------------------------------------------------------------------------
# Pallas kernel: Y = act(X @ W + b)    (conv-as-matmul hot path)
#   X tile bf16, W tile bf16 -> MXU with f32 accumulate; bias+ReLU in f32.
# ----------------------------------------------------------------------------
def _matmul_bias_act_kernel(x_ref, w_ref, b_ref, o_ref, *, relu):
    acc = jnp.dot(x_ref[...], w_ref[...], preferred_element_type=jnp.float32)
    acc = acc + b_ref[...]                      # (1, TN) broadcasts over rows
    if relu:
        acc = jnp.maximum(acc, 0.0)
    o_ref[...] = acc.astype(o_ref.dtype)


def matmul_bias_act(x, w, b, *, relu, out_dtype=jnp.float32):
    """x: (M, K) bf16, w: (K, N) bf16, b: (1, N) f32 -> (M, N) out_dtype."""
    M, K = x.shape
    K2, N = w.shape
    assert K == K2 and b.shape == (1, N)

    tm = M if M <= _TM_CAP else _TM_CAP         # full-M or 512-row tiles (mult. of 8)
    tn = N if N <= _TN_CAP else _TN_CAP         # full-N (<=512) or 512-col tiles
    grid = (pl.cdiv(M, tm), pl.cdiv(N, tn))

    flops = 2 * M * K * N
    bytes_accessed = (M * K + K * N) * x.dtype.itemsize \
        + M * N * jnp.dtype(out_dtype).itemsize + 4 * N

    return pl.pallas_call(
        functools.partial(_matmul_bias_act_kernel, relu=relu),
        out_shape=jax.ShapeDtypeStruct((M, N), out_dtype),
        grid=grid,
        in_specs=[
            pl.BlockSpec((tm, K), lambda i, j: (i, 0)),
            pl.BlockSpec((K, tn), lambda i, j: (0, j)),
            pl.BlockSpec((1, tn), lambda i, j: (0, j)),   # bias follows the N tile
        ],
        out_specs=pl.BlockSpec((tm, tn), lambda i, j: (i, j)),
        compiler_params=pltpu.CompilerParams(
            dimension_semantics=("parallel", "parallel"),
            vmem_limit_bytes=_VMEM_LIMIT),
        cost_estimate=pl.CostEstimate(
            flops=flops, transcendentals=0, bytes_accessed=int(bytes_accessed)),
    )(x, w, b)


# ----------------------------------------------------------------------------
# Fused head kernel: feats = relu(flat @ W1 + b1); value = feats @ W2 + b2
#   Removes a separate N=1 (masked-store) matmul and a kernel launch.
# ----------------------------------------------------------------------------
def _head_kernel(x_ref, w1_ref, b1_ref, w2_ref, b2_ref, feat_ref, val_ref):
    h = jnp.dot(x_ref[...], w1_ref[...], preferred_element_type=jnp.float32)
    h = jnp.maximum(h + b1_ref[...], 0.0)
    feat_ref[...] = h.astype(feat_ref.dtype)
    v = jnp.dot(h, w2_ref[...], preferred_element_type=jnp.float32) + b2_ref[...]
    val_ref[...] = v.astype(val_ref.dtype)


def fc_critic_head(flat, fc_w, fc_b, cr_w, cr_b):
    """flat: (B, Kf) bf16; fc_w: (Kf, H) bf16; cr_w: (H, 1) f32 -> (feats, value)."""
    B, Kf = flat.shape
    Hd = fc_w.shape[1]
    Vd = cr_w.shape[1]
    tm = B if B <= _TM_CAP else _TM_CAP
    grid = (pl.cdiv(B, tm),)

    return pl.pallas_call(
        _head_kernel,
        out_shape=(jax.ShapeDtypeStruct((B, Hd), jnp.float32),
                   jax.ShapeDtypeStruct((B, Vd), jnp.float32)),
        grid=grid,
        in_specs=[
            pl.BlockSpec((tm, Kf), lambda i: (i, 0)),
            pl.BlockSpec((Kf, Hd), lambda i: (0, 0)),
            pl.BlockSpec((1, Hd), lambda i: (0, 0)),
            pl.BlockSpec((Hd, Vd), lambda i: (0, 0)),
            pl.BlockSpec((1, Vd), lambda i: (0, 0)),
        ],
        out_specs=(pl.BlockSpec((tm, Hd), lambda i: (i, 0)),
                   pl.BlockSpec((tm, Vd), lambda i: (i, 0))),
        compiler_params=pltpu.CompilerParams(
            dimension_semantics=("parallel",),
            vmem_limit_bytes=_VMEM_LIMIT),
    )(flat, fc_w, fc_b, cr_w, cr_b)


# ----------------------------------------------------------------------------
# im2col glue (NHWC, strided slices only — no transposes) so each conv becomes
# a single Pallas matmul.  K ordering is (kh, kw, c_in), matching the weight
# layout produced in init_params.
# ----------------------------------------------------------------------------
def im2col_nhwc(x, k, stride):
    B, H, W, C = x.shape
    Ho = (H - k) // stride + 1
    Wo = (W - k) // stride + 1
    taps = []
    for kh in range(k):
        for kw in range(k):
            taps.append(x[:, kh:kh + stride * Ho:stride,
                          kw:kw + stride * Wo:stride, :])      # (B, Ho, Wo, C)
    p = jnp.stack(taps, axis=3)                                # (B, Ho, Wo, k*k, C)
    return p.reshape(B * Ho * Wo, k * k * C), Ho, Wo
    # TODO(synk): for large batches, fold this im2col into the Pallas body
    # (loop over (kh, kw) taps accumulating into a VMEM scratch) to avoid the
    # k*k-fold duplicated activation reads in HBM.


def conv2d_relu_nhwc(x, w_kn, b, *, stride, k):
    """PyTorch-semantics valid Conv2d + ReLU on NHWC activations."""
    B = x.shape[0]
    cout = w_kn.shape[1]
    patches, Ho, Wo = im2col_nhwc(x, k, stride)
    y = matmul_bias_act(patches, w_kn, b, relu=True, out_dtype=jnp.bfloat16)
    return y.reshape(B, Ho, Wo, cout)                          # stays NHWC


# ----------------------------------------------------------------------------
# Deterministic parameter init (orthogonal, like nn.init.orthogonal_),
# with weights pre-laid-out in their matmul (K, N) form.
# ----------------------------------------------------------------------------
def orthogonal(key, shape, gain=1.0):
    rows = shape[0]
    cols = int(np.prod(shape[1:]))
    a = jax.random.normal(key, (rows, cols), dtype=jnp.float32)
    if rows < cols:
        a = a.T
    q, r = jnp.linalg.qr(a)
    d = jnp.sign(jnp.diag(r))
    d = jnp.where(d == 0, 1.0, d)         # guard: never zero a column
    q = q * d
    if rows < cols:
        q = q.T
    return (gain * q).reshape(shape)


def init_params(key, in_channels, height, width):
    relu_gain = float(np.sqrt(2.0))       # nn.init.calculate_gain('relu')
    ks = jax.random.split(key, 5)
    # conv output spatial sizes (valid conv, PyTorch floor semantics)
    h1, w1 = (height - 8) // 4 + 1, (width - 8) // 4 + 1
    h2, w2 = (h1 - 4) // 2 + 1, (w1 - 4) // 2 + 1
    h3, w3 = h2 - 2, w2 - 2
    flat = 32 * h3 * w3
    # TODO(synk): the reference module declares Linear(32*H//8*W//8, 512), which is
    # inconsistent with the true conv output for general H,W; we size the fc layer
    # from the actual flattened conv output so the forward pass runs.

    def conv_mat(w_torch):
        # torch (Cout, Cin, k, k) -> (k*k*Cin, Cout) with K-order (kh, kw, cin)
        cout, cin, kk, _ = w_torch.shape
        return w_torch.transpose(2, 3, 1, 0).reshape(kk * kk * cin, cout)

    conv1 = orthogonal(ks[0], (32, in_channels, 8, 8), relu_gain)
    conv2 = orthogonal(ks[1], (64, 32, 4, 4), relu_gain)
    conv3 = orthogonal(ks[2], (32, 64, 3, 3), relu_gain)
    fc_t = orthogonal(ks[3], (512, flat), relu_gain)           # torch (out, in), in indexed NCHW
    # Permute fc rows once so they consume the NHWC flatten (== torch NCHW view(B,-1)).
    fc_kn = fc_t.reshape(512, 32, h3, w3).transpose(2, 3, 1, 0).reshape(h3 * w3 * 32, 512)
    critic = orthogonal(ks[4], (1, 512), 1.0)

    return dict(
        conv1_w=conv_mat(conv1).astype(jnp.bfloat16), conv1_b=jnp.zeros((1, 32), jnp.float32),
        conv2_w=conv_mat(conv2).astype(jnp.bfloat16), conv2_b=jnp.zeros((1, 64), jnp.float32),
        conv3_w=conv_mat(conv3).astype(jnp.bfloat16), conv3_b=jnp.zeros((1, 32), jnp.float32),
        fc_w=fc_kn.astype(jnp.bfloat16),              fc_b=jnp.zeros((1, 512), jnp.float32),
        critic_w=critic.T.astype(jnp.float32),        critic_b=jnp.zeros((1, 1), jnp.float32),
    )


# ----------------------------------------------------------------------------
# ActorCritic (use_cnn=True) -> CNNBase forward: returns (value, features).
# This is the forward used by act() / get_value() in the PyTorch module.
# ----------------------------------------------------------------------------
def actor_critic_base_forward(params, x):
    # x arrives NCHW float32 like the PyTorch module; move to NHWC bf16 once.
    x = jnp.transpose(x, (0, 2, 3, 1)).astype(jnp.bfloat16)
    h = conv2d_relu_nhwc(x, params["conv1_w"], params["conv1_b"], stride=4, k=8)
    h = conv2d_relu_nhwc(h, params["conv2_w"], params["conv2_b"], stride=2, k=4)
    h = conv2d_relu_nhwc(h, params["conv3_w"], params["conv3_b"], stride=1, k=3)
    B = h.shape[0]
    flat = h.reshape(B, -1)   # NHWC flatten; fc_w rows were permuted at init to match
    feats, value = fc_critic_head(flat, params["fc_w"], params["fc_b"],
                                  params["critic_w"], params["critic_b"])
    # TODO(synk): ActorCritic.act() also samples from a Categorical dist whose class
    # is not defined in the reference source; only the base forward (value, features)
    # is implemented here.
    return value, feats


if __name__ == "__main__":
    key = jax.random.PRNGKey(0)
    kx, kp = jax.random.split(key)

    B, C, H, W = 2, 4, 36, 36   # small NCHW input consistent with the CNN base
    x = jax.random.normal(kx, (B, C, H, W), dtype=jnp.float32)
    params = init_params(kp, C, H, W)

    fwd = jax.jit(actor_critic_base_forward)
    value, feats = fwd(params, x)
    jax.block_until_ready((value, feats))

    assert value.shape == (B, 1), value.shape
    assert feats.shape == (B, 512), feats.shape
    assert bool(jnp.all(jnp.isfinite(value))) and bool(jnp.all(jnp.isfinite(feats)))
    print("KERNEL_OK")
</pallas_src>

<mosaic_0001>
module attributes {stable_mosaic.version = 11 : i64} {
  func.func @_matmul_bias_act_kernel(%arg0: i32, %arg1: i32, %arg2: memref<128x256xbf16, #tpu.memory_space<vmem>>, %arg3: memref<256x32xbf16, #tpu.memory_space<vmem>>, %arg4: memref<1x32xf32, #tpu.memory_space<vmem>>, %arg5: memref<128x32xbf16, #tpu.memory_space<vmem>>) attributes {dimension_semantics = [#tpu.dimension_semantics<parallel>, #tpu.dimension_semantics<parallel>], iteration_bounds = array<i64: 1, 1>, scalar_prefetch = 0 : i64, scratch_operands = 0 : i64, tpu.core_type = #tpu.core_type<tc>, window_params = [{transform_indices = @transform_0, window_bounds = array<i64: 128, 256>}, {transform_indices = @transform_1, window_bounds = array<i64: 256, 32>}, {transform_indices = @transform_2, window_bounds = array<i64: 1, 32>}, {transform_indices = @transform_3, window_bounds = array<i64: 128, 32>}]} {
    %c0 = arith.constant 0 : index
    %c0_0 = arith.constant 0 : index
    %0 = vector.load %arg2[%c0, %c0_0] : memref<128x256xbf16, #tpu.memory_space<vmem>>, vector<128x256xbf16>
    %c0_1 = arith.constant 0 : index
    %c0_2 = arith.constant 0 : index
    %1 = vector.load %arg3[%c0_1, %c0_2] : memref<256x32xbf16, #tpu.memory_space<vmem>>, vector<256x32xbf16>
    %cst = arith.constant dense<0.000000e+00> : vector<128x32xf32>
    %2 = tpu.matmul %0, %1, %cst {dimension_numbers = #tpu.dot_dimension_numbers<[1], [0], [0], [1], [0, 0, 1, 1], [], []>} : vector<128x256xbf16>, vector<256x32xbf16>, vector<128x32xf32> -> vector<128x32xf32>
    %c0_3 = arith.constant 0 : index
    %c0_4 = arith.constant 0 : index
    %3 = vector.load %arg4[%c0_3, %c0_4] : memref<1x32xf32, #tpu.memory_space<vmem>>, vector<1x32xf32>
    %4 = vector.broadcast %3 : vector<1x32xf32> to vector<128x32xf32>
    %5 = arith.addf %2, %4 : vector<128x32xf32>
    %cst_5 = arith.constant 0.000000e+00 : f32
    %6 = vector.broadcast %cst_5 : f32 to vector<128x32xf32>
    %7 = arith.maximumf %5, %6 : vector<128x32xf32>
    %8 = arith.truncf %7 : vector<128x32xf32> to vector<128x32xbf16>
    %c0_6 = arith.constant 0 : index
    %c0_7 = arith.constant 0 : index
    %9 = vector.load %arg5[%c0_6, %c0_7] : memref<128x32xbf16, #tpu.memory_space<vmem>>, vector<128x32xbf16>
    tpu.vector_store %arg5[%c0_6, %c0_7], %8 {strides = array<i32>} : memref<128x32xbf16, #tpu.memory_space<vmem>>, vector<128x32xbf16>,
    return
  }
  func.func @transform_0(%arg0: i32, %arg1: i32) -> (i32, i32) {
    %c0_i32 = arith.constant 0 : i32
    %c0_i32_0 = arith.constant 0 : i32
    return %arg0, %c0_i32 : i32, i32
  }
  func.func @transform_1(%arg0: i32, %arg1: i32) -> (i32, i32) {
    %c0_i32 = arith.constant 0 : i32
    %c0_i32_0 = arith.constant 0 : i32
    return %c0_i32, %arg1 : i32, i32
  }
  func.func @transform_2(%arg0: i32, %arg1: i32) -> (i32, i32) {
    %c0_i32 = arith.constant 0 : i32
    %c0_i32_0 = arith.constant 0 : i32
    return %c0_i32, %arg1 : i32, i32
  }
  func.func @transform_3(%arg0: i32, %arg1: i32) -> (i32, i32) {
    %c0_i32 = arith.constant 0 : i32
    return %arg0, %arg1 : i32, i32
  }
}

module attributes {stable_mosaic.version = 11 : i64} {
  func.func @_matmul_bias_act_kernel(%arg0: i32, %arg1: i32, %arg2: memref<18x512xbf16, #tpu.memory_space<vmem>>, %arg3: memref<512x64xbf16, #tpu.memory_space<vmem>>, %arg4: memref<1x64xf32, #tpu.memory_space<vmem>>, %arg5: memref<18x64xbf16, #tpu.memory_space<vmem>>) attributes {dimension_semantics = [#tpu.dimension_semantics<parallel>, #tpu.dimension_semantics<parallel>], iteration_bounds = array<i64: 1, 1>, scalar_prefetch = 0 : i64, scratch_operands = 0 : i64, tpu.core_type = #tpu.core_type<tc>, window_params = [{transform_indices = @transform_0, window_bounds = array<i64: 18, 512>}, {transform_indices = @transform_1, window_bounds = array<i64: 512, 64>}, {transform_indices = @transform_2, window_bounds = array<i64: 1, 64>}, {transform_indices = @transform_3, window_bounds = array<i64: 18, 64>}]} {
    %c0 = arith.constant 0 : index
    %c0_0 = arith.constant 0 : index
    %0 = vector.load %arg2[%c0, %c0_0] : memref<18x512xbf16, #tpu.memory_space<vmem>>, vector<18x512xbf16>
    %c0_1 = arith.constant 0 : index
    %c0_2 = arith.constant 0 : index
    %1 = vector.load %arg3[%c0_1, %c0_2] : memref<512x64xbf16, #tpu.memory_space<vmem>>, vector<512x64xbf16>
    %cst = arith.constant dense<0.000000e+00> : vector<18x64xf32>
    %2 = tpu.matmul %0, %1, %cst {dimension_numbers = #tpu.dot_dimension_numbers<[1], [0], [0], [1], [0, 0, 1, 1], [], []>} : vector<18x512xbf16>, vector<512x64xbf16>, vector<18x64xf32> -> vector<18x64xf32>
    %c0_3 = arith.constant 0 : index
    %c0_4 = arith.constant 0 : index
    %3 = vector.load %arg4[%c0_3, %c0_4] : memref<1x64xf32, #tpu.memory_space<vmem>>, vector<1x64xf32>
    %4 = vector.broadcast %3 : vector<1x64xf32> to vector<18x64xf32>
    %5 = arith.addf %2, %4 : vector<18x64xf32>
    %cst_5 = arith.constant 0.000000e+00 : f32
    %6 = vector.broadcast %cst_5 : f32 to vector<18x64xf32>
    %7 = arith.maximumf %5, %6 : vector<18x64xf32>
    %8 = arith.truncf %7 : vector<18x64xf32> to vector<18x64xbf16>
    %c0_6 = arith.constant 0 : index
    %c0_7 = arith.constant 0 : index
    %9 = vector.load %arg5[%c0_6, %c0_7] : memref<18x64xbf16, #tpu.memory_space<vmem>>, vector<18x64xbf16>
    tpu.vector_store %arg5[%c0_6, %c0_7], %8 {strides = array<i32>} : memref<18x64xbf16, #tpu.memory_space<vmem>>, vector<18x64xbf16>,
    return
  }
  func.func @transform_0(%arg0: i32, %arg1: i32) -> (i32, i32) {
    %c0_i32 = arith.constant 0 : i32
    %c0_i32_0 = arith.constant 0 : i32
    return %arg0, %c0_i32 : i32, i32
  }
  func.func @transform_1(%arg0: i32, %arg1: i32) -> (i32, i32) {
    %c0_i32 = arith.constant 0 : i32
    %c0_i32_0 = arith.constant 0 : i32
    return %c0_i32, %arg1 : i32, i32
  }
  func.func @transform_2(%arg0: i32, %arg1: i32) -> (i32, i32) {
    %c0_i32 = arith.constant 0 : i32
    %c0_i32_0 = arith.constant 0 : i32
    return %c0_i32, %arg1 : i32, i32
  }
  func.func @transform_3(%arg0: i32, %arg1: i32) -> (i32, i32) {
    %c0_i32 = arith.constant 0 : i32
    return %arg0, %arg1 : i32, i32
  }
}

module attributes {stable_mosaic.version = 11 : i64} {
  func.func @_matmul_bias_act_kernel(%arg0: i32, %arg1: i32, %arg2: memref<2x576xbf16, #tpu.memory_space<vmem>>, %arg3: memref<576x32xbf16, #tpu.memory_space<vmem>>, %arg4: memref<1x32xf32, #tpu.memory_space<vmem>>, %arg5: memref<2x32xbf16, #tpu.memory_space<vmem>>) attributes {dimension_semantics = [#tpu.dimension_semantics<parallel>, #tpu.dimension_semantics<parallel>], iteration_bounds = array<i64: 1, 1>, scalar_prefetch = 0 : i64, scratch_operands = 0 : i64, tpu.core_type = #tpu.core_type<tc>, window_params = [{transform_indices = @transform_0, window_bounds = array<i64: 2, 576>}, {transform_indices = @transform_1, window_bounds = array<i64: 576, 32>}, {transform_indices = @transform_2, window_bounds = array<i64: 1, 32>}, {transform_indices = @transform_3, window_bounds = array<i64: 2, 32>}]} {
    %c0 = arith.constant 0 : index
    %c0_0 = arith.constant 0 : index
    %0 = vector.load %arg2[%c0, %c0_0] : memref<2x576xbf16, #tpu.memory_space<vmem>>, vector<2x576xbf16>
    %c0_1 = arith.constant 0 : index
    %c0_2 = arith.constant 0 : index
    %1 = vector.load %arg3[%c0_1, %c0_2] : memref<576x32xbf16, #tpu.memory_space<vmem>>, vector<576x32xbf16>
    %cst = arith.constant dense<0.000000e+00> : vector<2x32xf32>
    %2 = tpu.matmul %0, %1, %cst {dimension_numbers = #tpu.dot_dimension_numbers<[1], [0], [0], [1], [0, 0, 1, 1], [], []>} : vector<2x576xbf16>, vector<576x32xbf16>, vector<2x32xf32> -> vector<2x32xf32>
    %c0_3 = arith.constant 0 : index
    %c0_4 = arith.constant 0 : index
    %3 = vector.load %arg4[%c0_3, %c0_4] : memref<1x32xf32, #tpu.memory_space<vmem>>, vector<1x32xf32>
    %4 = vector.broadcast %3 : vector<1x32xf32> to vector<2x32xf32>
    %5 = arith.addf %2, %4 : vector<2x32xf32>
    %cst_5 = arith.constant 0.000000e+00 : f32
    %6 = vector.broadcast %cst_5 : f32 to vector<2x32xf32>
    %7 = arith.maximumf %5, %6 : vector<2x32xf32>
    %8 = arith.truncf %7 : vector<2x32xf32> to vector<2x32xbf16>
    %c0_6 = arith.constant 0 : index
    %c0_7 = arith.constant 0 : index
    %9 = vector.load %arg5[%c0_6, %c0_7] : memref<2x32xbf16, #tpu.memory_space<vmem>>, vector<2x32xbf16>
    tpu.vector_store %arg5[%c0_6, %c0_7], %8 {strides = array<i32>} : memref<2x32xbf16, #tpu.memory_space<vmem>>, vector<2x32xbf16>,
    return
  }
  func.func @transform_0(%arg0: i32, %arg1: i32) -> (i32, i32) {
    %c0_i32 = arith.constant 0 : i32
    %c0_i32_0 = arith.constant 0 : i32
    return %arg0, %c0_i32 : i32, i32
  }
  func.func @transform_1(%arg0: i32, %arg1: i32) -> (i32, i32) {
    %c0_i32 = arith.constant 0 : i32
    %c0_i32_0 = arith.constant 0 : i32
    return %c0_i32, %arg1 : i32, i32
  }
  func.func @transform_2(%arg0: i32, %arg1: i32) -> (i32, i32) {
    %c0_i32 = arith.constant 0 : i32
    %c0_i32_0 = arith.constant 0 : i32
    return %c0_i32, %arg1 : i32, i32
  }
  func.func @transform_3(%arg0: i32, %arg1: i32) -> (i32, i32) {
    %c0_i32 = arith.constant 0 : i32
    return %arg0, %arg1 : i32, i32
  }
}

module attributes {stable_mosaic.version = 11 : i64} {
  func.func @_head_kernel(%arg0: i32, %arg1: memref<2x32xbf16, #tpu.memory_space<vmem>>, %arg2: memref<32x512xbf16, #tpu.memory_space<vmem>>, %arg3: memref<1x512xf32, #tpu.memory_space<vmem>>, %arg4: memref<512x1xf32, #tpu.memory_space<vmem>>, %arg5: memref<1x1xf32, #tpu.memory_space<vmem>>, %arg6: memref<2x512xf32, #tpu.memory_space<vmem>>, %arg7: memref<2x1xf32, #tpu.memory_space<vmem>>) attributes {dimension_semantics = [#tpu.dimension_semantics<parallel>], iteration_bounds = array<i64: 1>, scalar_prefetch = 0 : i64, scratch_operands = 0 : i64, tpu.core_type = #tpu.core_type<tc>, window_params = [{transform_indices = @transform_0, window_bounds = array<i64: 2, 32>}, {pipeline_mode = #tpu.pipeline_mode<synchronous>, transform_indices = @transform_1, window_bounds = array<i64: 32, 512>}, {pipeline_mode = #tpu.pipeline_mode<synchronous>, transform_indices = @transform_2, window_bounds = array<i64: 1, 512>}, {pipeline_mode = #tpu.pipeline_mode<synchronous>, transform_indices = @transform_3, window_bounds = array<i64: 512, 1>}, {pipeline_mode = #tpu.pipeline_mode<synchronous>, transform_indices = @transform_4, window_bounds = array<i64: 1, 1>}, {transform_indices = @transform_5, window_bounds = array<i64: 2, 512>}, {transform_indices = @transform_6, window_bounds = array<i64: 2, 1>}]} {
    %c0 = arith.constant 0 : index
    %c0_0 = arith.constant 0 : index
    %0 = vector.load %arg1[%c0, %c0_0] : memref<2x32xbf16, #tpu.memory_space<vmem>>, vector<2x32xbf16>
    %c0_1 = arith.constant 0 : index
    %c0_2 = arith.constant 0 : index
    %1 = vector.load %arg2[%c0_1, %c0_2] : memref<32x512xbf16, #tpu.memory_space<vmem>>, vector<32x512xbf16>
    %cst = arith.constant dense<0.000000e+00> : vector<2x512xf32>
    %2 = tpu.matmul %0, %1, %cst {dimension_numbers = #tpu.dot_dimension_numbers<[1], [0], [0], [1], [0, 0, 1, 1], [], []>} : vector<2x32xbf16>, vector<32x512xbf16>, vector<2x512xf32> -> vector<2x512xf32>
    %c0_3 = arith.constant 0 : index
    %c0_4 = arith.constant 0 : index
    %3 = vector.load %arg3[%c0_3, %c0_4] : memref<1x512xf32, #tpu.memory_space<vmem>>, vector<1x512xf32>
    %4 = vector.broadcast %3 : vector<1x512xf32> to vector<2x512xf32>
    %5 = arith.addf %2, %4 : vector<2x512xf32>
    %cst_5 = arith.constant 0.000000e+00 : f32
    %6 = vector.broadcast %cst_5 : f32 to vector<2x512xf32>
    %7 = arith.maximumf %5, %6 : vector<2x512xf32>
    %c0_6 = arith.constant 0 : index
    %c0_7 = arith.constant 0 : index
    %8 = vector.load %arg6[%c0_6, %c0_7] : memref<2x512xf32, #tpu.memory_space<vmem>>, vector<2x512xf32>
    tpu.vector_store %arg6[%c0_6, %c0_7], %7 {strides = array<i32>} : memref<2x512xf32, #tpu.memory_space<vmem>>, vector<2x512xf32>,
    %c0_8 = arith.constant 0 : index
    %c0_9 = arith.constant 0 : index
    %9 = vector.load %arg4[%c0_8, %c0_9] : memref<512x1xf32, #tpu.memory_space<vmem>>, vector<512x1xf32>
    %cst_10 = arith.constant dense<0.000000e+00> : vector<2x1xf32>
    %10 = tpu.matmul %7, %9, %cst_10 {dimension_numbers = #tpu.dot_dimension_numbers<[1], [0], [0], [1], [0, 0, 1, 1], [], []>} : vector<2x512xf32>, vector<512x1xf32>, vector<2x1xf32> -> vector<2x1xf32>
    %c0_11 = arith.constant 0 : index
    %c0_12 = arith.constant 0 : index
    %11 = vector.load %arg5[%c0_11, %c0_12] : memref<1x1xf32, #tpu.memory_space<vmem>>, vector<1x1xf32>
    %12 = vector.broadcast %11 : vector<1x1xf32> to vector<2x1xf32>
    %13 = arith.addf %10, %12 : vector<2x1xf32>
    %c0_13 = arith.constant 0 : index
    %c0_14 = arith.constant 0 : index
    %14 = vector.load %arg7[%c0_13, %c0_14] : memref<2x1xf32, #tpu.memory_space<vmem>>, vector<2x1xf32>
    tpu.vector_store %arg7[%c0_13, %c0_14], %13 {strides = array<i32>} : memref<2x1xf32, #tpu.memory_space<vmem>>, vector<2x1xf32>,
    return
  }
  func.func @transform_0(%arg0: i32) -> (i32, i32) {
    %c0_i32 = arith.constant 0 : i32
    %c0_i32_0 = arith.constant 0 : i32
    return %arg0, %c0_i32 : i32, i32
  }
  func.func @transform_1(%arg0: i32) -> (i32, i32) {
    %c0_i32 = arith.constant 0 : i32
    %c0_i32_0 = arith.constant 0 : i32
    %c0_i32_1 = arith.constant 0 : i32
    return %c0_i32, %c0_i32_0 : i32, i32
  }
  func.func @transform_2(%arg0: i32) -> (i32, i32) {
    %c0_i32 = arith.constant 0 : i32
    %c0_i32_0 = arith.constant 0 : i32
    %c0_i32_1 = arith.constant 0 : i32
    return %c0_i32, %c0_i32_0 : i32, i32
  }
  func.func @transform_3(%arg0: i32) -> (i32, i32) {
    %c0_i32 = arith.constant 0 : i32
    %c0_i32_0 = arith.constant 0 : i32
    %c0_i32_1 = arith.constant 0 : i32
    return %c0_i32, %c0_i32_0 : i32, i32
  }
  func.func @transform_4(%arg0: i32) -> (i32, i32) {
    %c0_i32 = arith.constant 0 : i32
    %c0_i32_0 = arith.constant 0 : i32
    %c0_i32_1 = arith.constant 0 : i32
    return %c0_i32, %c0_i32_0 : i32, i32
  }
  func.func @transform_5(%arg0: i32) -> (i32, i32) {
    %c0_i32 = arith.constant 0 : i32
    %c0_i32_0 = arith.constant 0 : i32
    return %arg0, %c0_i32 : i32, i32
  }
  func.func @transform_6(%arg0: i32) -> (i32, i32) {
    %c0_i32 = arith.constant 0 : i32
    %c0_i32_0 = arith.constant 0 : i32
    return %arg0, %c0_i32 : i32, i32
  }
}

</mosaic_0001>

<llo_original>
// kernel: actor_critic_base_forward.4
$region0: #{actor_critic_base_forward.4}
  #allocation0 [shape = 'u32[]', space=smem, size = 0x4, offset = 0x4, fixed_abs, tag = 'smem constant byte address 0x4 - core index']
  #allocation1 [shape = 'u32[72,128]{1,0:T(1,128)}', space=vmem, size = 0x9000, scoped, tag = 'internal scratch']
  %s0 = inlined_call_operand.vmem [shape: bf16[128,256], index: 0, kind: input, shape index: {}]
  %s1 = inlined_call_operand.vmem [shape: bf16[256,32], index: 1, kind: input, shape index: {}]
  %s2 = inlined_call_operand.vmem [shape: f32[1,32], index: 2, kind: input, shape index: {}]
  %s3 = inlined_call_operand.vmem [shape: bf16[128,32], index: 3, kind: output, shape index: {}]
  %s4 = sld [smem:[#allocation0]]
  $region22: #{actor_critic_base_forward.4} parent=0
    _
  %s6 = ssub.s32 1, %s4
  %s7 = scalar_select 0, %s6, %s4
  // Predicated region
  $region2: #{actor_critic_base_forward.4} parent=0 // pred_check
    _
  $region3: #{actor_critic_base_forward.4} parent=0 // pred_check_branch
    %9 = sbr.rel (0) target = $region5
  $region4: #{actor_critic_base_forward.4} parent=0 // pred_region
    _
  $region5: #{actor_critic_base_forward.4} parent=0 // pred_fallthru
    _
  // Predicated region
  $region6: #{actor_critic_base_forward.4} parent=0 // pred_check
    _
  $region7: #{actor_critic_base_forward.4} parent=0 // pred_check_branch
    %11 = sbr.rel (0) target = $region9
  $region8: #{actor_critic_base_forward.4} parent=0 // pred_region
    _
  $region9: #{actor_critic_base_forward.4} parent=0 // pred_fallthru
    _
  // Predicated region
  $region10: #{actor_critic_base_forward.4} parent=0 // pred_check
    _
  $region11: #{actor_critic_base_forward.4} parent=0 // pred_check_branch
    %13 = sbr.rel (0) target = $region13
  $region12: #{actor_critic_base_forward.4} parent=0 // pred_region
    _
  $region13: #{actor_critic_base_forward.4} parent=0 // pred_fallthru
    _
  %v14 = vld [vmem:[%s0] sm:$0xff]
  %v15 = vld [vmem:[%s0 + $0x8] sm:$0xff]
  %v16 = vld [vmem:[%s0 + $0x10] sm:$0xff]
  %v17 = vld [vmem:[%s0 + $0x18] sm:$0xff]
  %v18 = vld [vmem:[%s0 + $0x20] sm:$0xff]
  %v19 = vld [vmem:[%s0 + $0x28] sm:$0xff]
  %v20 = vld [vmem:[%s0 + $0x30] sm:$0xff]
  %v21 = vld [vmem:[%s0 + $0x38] sm:$0xff]
  %v22 = vld [vmem:[%s0 + $0x40] sm:$0xff]
  %v23 = vld [vmem:[%s0 + $0x48] sm:$0xff]
  %v24 = vld [vmem:[%s0 + $0x50] sm:$0xff]
  %v25 = vld [vmem:[%s0 + $0x58] sm:$0xff]
  %v26 = vld [vmem:[%s0 + $0x60] sm:$0xff]
  %v27 = vld [vmem:[%s0 + $0x68] sm:$0xff]
  %v28 = vld [vmem:[%s0 + $0x70] sm:$0xff]
  %v29 = vld [vmem:[%s0 + $0x78] sm:$0xff]
  %v30 = vld [vmem:[%s1] sm:$0xf]
  %v31 = vld [vmem:[%s1 + $0x4] sm:$0xf]
  %v32 = vld [vmem:[%s1 + $0x8] sm:$0xf]
  %v33 = vld [vmem:[%s1 + $0xc] sm:$0xf]
  %v34 = vld [vmem:[%s1 + $0x10] sm:$0xf]
  %v35 = vld [vmem:[%s1 + $0x14] sm:$0xf]
  %v36 = vld [vmem:[%s1 + $0x18] sm:$0xf]
  %v37 = vld [vmem:[%s1 + $0x1c] sm:$0xf]
  %v38 = vld [vmem:[%s1 + $0x20] sm:$0xf]
  %v39 = vld [vmem:[%s1 + $0x24] sm:$0xf]
  %v40 = vld [vmem:[%s1 + $0x28] sm:$0xf]
  %v41 = vld [vmem:[%s1 + $0x2c] sm:$0xf]
  %v42 = vld [vmem:[%s1 + $0x30] sm:$0xf]
  %v43 = vld [vmem:[%s1 + $0x34] sm:$0xf]
  %v44 = vld [vmem:[%s1 + $0x38] sm:$0xf]
  %v45 = vld [vmem:[%s1 + $0x3c] sm:$0xf]
  %v46 = vld [vmem:[%s1 + $0x40] sm:$0xf]
  %v47 = vld [vmem:[%s1 + $0x44] sm:$0xf]
  %v48 = vld [vmem:[%s1 + $0x48] sm:$0xf]
  %v49 = vld [vmem:[%s1 + $0x4c] sm:$0xf]
  %v50 = vld [vmem:[%s1 + $0x50] sm:$0xf]
  %v51 = vld [vmem:[%s1 + $0x54] sm:$0xf]
  %v52 = vld [vmem:[%s1 + $0x58] sm:$0xf]
  %v53 = vld [vmem:[%s1 + $0x5c] sm:$0xf]
  %v54 = vld [vmem:[%s1 + $0x60] sm:$0xf]
  %v55 = vld [vmem:[%s1 + $0x64] sm:$0xf]
  %v56 = vld [vmem:[%s1 + $0x68] sm:$0xf]
  %v57 = vld [vmem:[%s1 + $0x6c] sm:$0xf]
  %v58 = vld [vmem:[%s1 + $0x70] sm:$0xf]
  %v59 = vld [vmem:[%s1 + $0x74] sm:$0xf]
  %v60 = vld [vmem:[%s1 + $0x78] sm:$0xf]
  %v61 = vld [vmem:[%s1 + $0x7c] sm:$0xf]
  %v62 = vld [vmem:[%s2] sm:$0x1]
  %v64 = vperm.slane %v62, 0
  %v82 = vunpack.c.l.b16 %v14
  %v83 = vunpack.c.h.b16 %v14
  %v84 = vunpack.c.l.b16 %v15
  %v85 = vunpack.c.h.b16 %v15
  %v86 = vunpack.c.l.b16 %v16
  %v87 = vunpack.c.h.b16 %v16
  %v88 = vunpack.c.l.b16 %v17
  %v89 = vunpack.c.h.b16 %v17
  %v90 = vunpack.c.l.b16 %v18
  %v91 = vunpack.c.h.b16 %v18
  %v92 = vunpack.c.l.b16 %v19
  %v93 = vunpack.c.h.b16 %v19
  %v94 = vunpack.c.l.b16 %v20
  %v95 = vunpack.c.h.b16 %v20
  %v96 = vunpack.c.l.b16 %v21
  %v97 = vunpack.c.h.b16 %v21
  %v98 = vunpack.c.l.b16 %v22
  %v99 = vunpack.c.h.b16 %v22
  %v100 = vunpack.c.l.b16 %v23
  %v101 = vunpack.c.h.b16 %v23
  %v102 = vunpack.c.l.b16 %v24
  %v103 = vunpack.c.h.b16 %v24
  %v104 = vunpack.c.l.b16 %v25
  %v105 = vunpack.c.h.b16 %v25
  %v106 = vunpack.c.l.b16 %v26
  %v107 = vunpack.c.h.b16 %v26
  %v108 = vunpack.c.l.b16 %v27
  %v109 = vunpack.c.h.b16 %v27
  %v110 = vunpack.c.l.b16 %v28
  %v111 = vunpack.c.h.b16 %v28
  %v112 = vunpack.c.l.b16 %v29
  %v113 = vunpack.c.h.b16 %v29
  %v114 = vpack.c.b16 %v84, %v82
  %v115 = vpack.c.b16 %v85, %v83
  %v116 = vpack.c.b16 %v88, %v86
  %v117 = vpack.c.b16 %v89, %v87
  %v118 = vpack.c.b16 %v92, %v90
  %v119 = vpack.c.b16 %v93, %v91
  %v120 = vpack.c.b16 %v96, %v94
  %v121 = vpack.c.b16 %v97, %v95
  %v122 = vpack.c.b16 %v100, %v98
  %v123 = vpack.c.b16 %v101, %v99
  %v124 = vpack.c.b16 %v104, %v102
  %v125 = vpack.c.b16 %v105, %v103
  %v126 = vpack.c.b16 %v108, %v106
  %v127 = vpack.c.b16 %v109, %v107
  %v128 = vpack.c.b16 %v112, %v110
  %v129 = vpack.c.b16 %v113, %v111
  %v178 = vunpack.c.l.b16 %v30
  %v179 = vunpack.c.l.b16 %v31
  %v180 = vunpack.c.l.b16 %v32
  %v181 = vunpack.c.l.b16 %v33
  %v182 = vunpack.c.l.b16 %v34
  %v183 = vunpack.c.l.b16 %v35
  %v184 = vunpack.c.l.b16 %v36
  %v185 = vunpack.c.l.b16 %v37
  %v186 = vunpack.c.l.b16 %v38
  %v187 = vunpack.c.l.b16 %v39
  %v188 = vunpack.c.l.b16 %v40
  %v189 = vunpack.c.l.b16 %v41
  %v190 = vunpack.c.l.b16 %v42
  %v191 = vunpack.c.l.b16 %v43
  %v192 = vunpack.c.l.b16 %v44
  %v193 = vunpack.c.l.b16 %v45
  %v194 = vunpack.c.l.b16 %v46
  %v195 = vunpack.c.l.b16 %v47
  %v196 = vunpack.c.l.b16 %v48
  %v197 = vunpack.c.l.b16 %v49
  %v198 = vunpack.c.l.b16 %v50
  %v199 = vunpack.c.l.b16 %v51
  %v200 = vunpack.c.l.b16 %v52
  %v201 = vunpack.c.l.b16 %v53
  %v202 = vunpack.c.l.b16 %v54
  %v203 = vunpack.c.l.b16 %v55
  %v204 = vunpack.c.l.b16 %v56
  %v205 = vunpack.c.l.b16 %v57
  %v206 = vunpack.c.l.b16 %v58
  %v207 = vunpack.c.l.b16 %v59
  %v208 = vunpack.c.l.b16 %v60
  %v209 = vunpack.c.l.b16 %v61
  %v210 = vpack.c.b16 %v179, %v178
  %v211 = vpack.c.b16 %v181, %v180
  %v212 = vpack.c.b16 %v183, %v182
  %v213 = vpack.c.b16 %v185, %v184
  %v214 = vpack.c.b16 %v187, %v186
  %v215 = vpack.c.b16 %v189, %v188
  %v216 = vpack.c.b16 %v191, %v190
  %v217 = vpack.c.b16 %v193, %v192
  %v218 = vpack.c.b16 %v195, %v194
  %v219 = vpack.c.b16 %v197, %v196
  %v220 = vpack.c.b16 %v199, %v198
  %v221 = vpack.c.b16 %v201, %v200
  %v222 = vpack.c.b16 %v203, %v202
  %v223 = vpack.c.b16 %v205, %v204
  %v224 = vpack.c.b16 %v207, %v206
  %v225 = vpack.c.b16 %v209, %v208
  %242 = vmatpush.bf16.msra.mxu0 %v217
  %243 = vmatpush.bf16.msra.mxu0 %v216
  %244 = vmatpush.bf16.msra.mxu0 %v215
  %245 = vmatpush.bf16.msra.mxu0 %v214
  %246 = vmatpush.bf16.msra.mxu0 %v213
  %247 = vmatpush.bf16.msra.mxu0 %v212
  %248 = vmatpush.bf16.msra.mxu0 %v211
  %249 = vmatpush.bf16.msra.mxu0 %v210
  %250 = vmatmul.bf16.gmra.mxu0 %v114
  %v251 = vpop.f32.mrf.mxu0
  %v252 = vadd.f32 %v64, %v251
  %v253 = vpop.f32.mrf.mxu0
  %v254 = vadd.f32 %v64, %v253
  %255 = vmatmul.bf16.gmra.mxu0 %v116
  %v256 = vpop.f32.mrf.mxu0
  %v257 = vadd.f32 %v64, %v256
  %v258 = vpop.f32.mrf.mxu0
  %v259 = vadd.f32 %v64, %v258
  %260 = vmatmul.bf16.gmra.mxu0 %v118
  %v261 = vpop.f32.mrf.mxu0
  %v262 = vadd.f32 %v64, %v261
  %v263 = vpop.f32.mrf.mxu0
  %v264 = vadd.f32 %v64, %v263
  %265 = vmatmul.bf16.gmra.mxu0 %v120
  %v266 = vpop.f32.mrf.mxu0
  %v267 = vadd.f32 %v64, %v266
  %v268 = vpop.f32.mrf.mxu0
  %v269 = vadd.f32 %v64, %v268
  %270 = vmatmul.bf16.gmra.mxu0 %v122
  %v271 = vpop.f32.mrf.mxu0
  %v272 = vadd.f32 %v64, %v271
  %v273 = vpop.f32.mrf.mxu0
  %v274 = vadd.f32 %v64, %v273
  %275 = vmatmul.bf16.gmra.mxu0 %v124
  %v276 = vpop.f32.mrf.mxu0
  %v277 = vadd.f32 %v64, %v276
  %v278 = vpop.f32.mrf.mxu0
  %v279 = vadd.f32 %v64, %v278
  %280 = vmatmul.bf16.gmra.mxu0 %v126
  %v281 = vpop.f32.mrf.mxu0
  %v282 = vadd.f32 %v64, %v281
  %v283 = vpop.f32.mrf.mxu0
  %v284 = vadd.f32 %v64, %v283
  %285 = vmatmul.bf16.gmra.mxu0 %v128
  %v286 = vpop.f32.mrf.mxu0
  %v287 = vadd.f32 %v64, %v286
  %v288 = vpop.f32.mrf.mxu0
  %v289 = vadd.f32 %v64, %v288
  %290 = vdwg.mxu0
  %291 = vmatpush.bf16.msra.mxu0 %v225
  %292 = vmatpush.bf16.msra.mxu0 %v224
  %293 = vmatpush.bf16.msra.mxu0 %v223
  %294 = vmatpush.bf16.msra.mxu0 %v222
  %295 = vmatpush.bf16.msra.mxu0 %v221
  %296 = vmatpush.bf16.msra.mxu0 %v220
  %297 = vmatpush.bf16.msra.mxu0 %v219
  %298 = vmatpush.bf16.msra.mxu0 %v218
  %299 = vmatmul.bf16.gmra.mxu0 %v115
  %v300 = vpop.f32.mrf.mxu0
  %v301 = vadd.f32 %v252, %v300
  %v302 = vpop.f32.mrf.mxu0
  %v303 = vadd.f32 %v254, %v302
  %304 = vmatmul.bf16.gmra.mxu0 %v117
  %v305 = vpop.f32.mrf.mxu0
  %v306 = vadd.f32 %v257, %v305
  %v307 = vpop.f32.mrf.mxu0
  %v308 = vadd.f32 %v259, %v307
  %309 = vmatmul.bf16.gmra.mxu0 %v119
  %v310 = vpop.f32.mrf.mxu0
  %v311 = vadd.f32 %v262, %v310
  %v312 = vpop.f32.mrf.mxu0
  %v313 = vadd.f32 %v264, %v312
  %314 = vmatmul.bf16.gmra.mxu0 %v121
  %v315 = vpop.f32.mrf.mxu0
  %v316 = vadd.f32 %v267, %v315
  %v317 = vpop.f32.mrf.mxu0
  %v318 = vadd.f32 %v269, %v317
  %319 = vmatmul.bf16.gmra.mxu0 %v123
  %v320 = vpop.f32.mrf.mxu0
  %v321 = vadd.f32 %v272, %v320
  %v322 = vpop.f32.mrf.mxu0
  %v323 = vadd.f32 %v274, %v322
  %324 = vmatmul.bf16.gmra.mxu0 %v125
  %v325 = vpop.f32.mrf.mxu0
  %v326 = vadd.f32 %v277, %v325
  %v327 = vpop.f32.mrf.mxu0
  %v328 = vadd.f32 %v279, %v327
  %329 = vmatmul.bf16.gmra.mxu0 %v127
  %v330 = vpop.f32.mrf.mxu0
  %v331 = vadd.f32 %v282, %v330
  %v332 = vpop.f32.mrf.mxu0
  %v333 = vadd.f32 %v284, %v332
  %334 = vmatmul.bf16.gmra.mxu0 %v129
  %v335 = vpop.f32.mrf.mxu0
  %v336 = vadd.f32 %v287, %v335
  %v337 = vpop.f32.mrf.mxu0
  %v338 = vadd.f32 %v289, %v337
  %339 = vdwg.mxu0
  %v340 = vmax.f32 %v301, 0.0
  %v341 = vmax.f32 %v303, 0.0
  %v342 = vmax.f32 %v306, 0.0
  %v343 = vmax.f32 %v308, 0.0
  %v344 = vmax.f32 %v311, 0.0
  %v345 = vmax.f32 %v313, 0.0
  %v346 = vmax.f32 %v316, 0.0
  %v347 = vmax.f32 %v318, 0.0
  %v348 = vmax.f32 %v321, 0.0
  %v349 = vmax.f32 %v323, 0.0
  %v350 = vmax.f32 %v326, 0.0
  %v351 = vmax.f32 %v328, 0.0
  %v352 = vmax.f32 %v331, 0.0
  %v353 = vmax.f32 %v333, 0.0
  %v354 = vmax.f32 %v336, 0.0
  %v355 = vmax.f32 %v338, 0.0
  %v356 = vpack.c.bf16 %v340, %v340
  %v357 = vpack.c.bf16 %v341, %v341
  %v358 = vpack.c.bf16 %v342, %v342
  %v359 = vpack.c.bf16 %v343, %v343
  %v360 = vpack.c.bf16 %v344, %v344
  %v361 = vpack.c.bf16 %v345, %v345
  %v362 = vpack.c.bf16 %v346, %v346
  %v363 = vpack.c.bf16 %v347, %v347
  %v364 = vpack.c.bf16 %v348, %v348
  %v365 = vpack.c.bf16 %v349, %v349
  %v366 = vpack.c.bf16 %v350, %v350
  %v367 = vpack.c.bf16 %v351, %v351
  %v368 = vpack.c.bf16 %v352, %v352
  %v369 = vpack.c.bf16 %v353, %v353
  %v370 = vpack.c.bf16 %v354, %v354
  %v371 = vpack.c.bf16 %v355, %v355
  %vm372 = vcmask 257024
  %373 = vst.msk [vmem:[%s3] sm:$0xf] %vm372, %v356
  %374 = vst.msk [vmem:[%s3 + $0x4] sm:$0xf] %vm372, %v357
  %375 = vst.msk [vmem:[%s3 + $0x8] sm:$0xf] %vm372, %v358
  %376 = vst.msk [vmem:[%s3 + $0xc] sm:$0xf] %vm372, %v359
  %377 = vst.msk [vmem:[%s3 + $0x10] sm:$0xf] %vm372, %v360
  %378 = vst.msk [vmem:[%s3 + $0x14] sm:$0xf] %vm372, %v361
  %379 = vst.msk [vmem:[%s3 + $0x18] sm:$0xf] %vm372, %v362
  %380 = vst.msk [vmem:[%s3 + $0x1c] sm:$0xf] %vm372, %v363
  %381 = vst.msk [vmem:[%s3 + $0x20] sm:$0xf] %vm372, %v364
  %382 = vst.msk [vmem:[%s3 + $0x24] sm:$0xf] %vm372, %v365
  %383 = vst.msk [vmem:[%s3 + $0x28] sm:$0xf] %vm372, %v366
  %384 = vst.msk [vmem:[%s3 + $0x2c] sm:$0xf] %vm372, %v367
  %385 = vst.msk [vmem:[%s3 + $0x30] sm:$0xf] %vm372, %v368
  %386 = vst.msk [vmem:[%s3 + $0x34] sm:$0xf] %vm372, %v369
  %387 = vst.msk [vmem:[%s3 + $0x38] sm:$0xf] %vm372, %v370
  %388 = vst.msk [vmem:[%s3 + $0x3c] sm:$0xf] %vm372, %v371
  // Predicated region
  $region14: #{actor_critic_base_forward.4} parent=0 // pred_check
    _
  $region15: #{actor_critic_base_forward.4} parent=0 // pred_check_branch
    %390 = sbr.rel (0) target = $region17
  $region16: #{actor_critic_base_forward.4} parent=0 // pred_region
    _
  $region17: #{actor_critic_base_forward.4} parent=0 // pred_fallthru
    _
  // Predicated region
  $region18: #{actor_critic_base_forward.4} parent=0 // pred_check
    _
  $region19: #{actor_critic_base_forward.4} parent=0 // pred_check_branch
    %392 = sbr.rel (0) target = $region21
  $region20: #{actor_critic_base_forward.4} parent=0 // pred_region
    _
  $region21: #{actor_critic_base_forward.4} parent=0 // pred_fallthru
    _

// kernel: actor_critic_base_forward.5
$region0: #{actor_critic_base_forward.5}
  #allocation0 [shape = 'u32[]', space=smem, size = 0x4, offset = 0x4, fixed_abs, tag = 'smem constant byte address 0x4 - core index']
  #allocation1 [shape = 'u32[72,128]{1,0:T(1,128)}', space=vmem, size = 0x9000, scoped, tag = 'internal scratch']
  %s0 = inlined_call_operand.vmem [shape: bf16[18,512], index: 0, kind: input, shape index: {}]
  %s1 = inlined_call_operand.vmem [shape: bf16[512,64], index: 1, kind: input, shape index: {}]
  %s2 = inlined_call_operand.vmem [shape: f32[1,64], index: 2, kind: input, shape index: {}]
  %s3 = inlined_call_operand.vmem [shape: bf16[18,64], index: 3, kind: output, shape index: {}]
  %s4 = sld [smem:[#allocation0]]
  $region22: #{actor_critic_base_forward.5} parent=0
    _
  %s6 = ssub.s32 1, %s4
  %s7 = scalar_select 0, %s6, %s4
  // Predicated region
  $region2: #{actor_critic_base_forward.5} parent=0 // pred_check
    _
  $region3: #{actor_critic_base_forward.5} parent=0 // pred_check_branch
    %9 = sbr.rel (0) target = $region5
  $region4: #{actor_critic_base_forward.5} parent=0 // pred_region
    _
  $region5: #{actor_critic_base_forward.5} parent=0 // pred_fallthru
    _
  // Predicated region
  $region6: #{actor_critic_base_forward.5} parent=0 // pred_check
    _
  $region7: #{actor_critic_base_forward.5} parent=0 // pred_check_branch
    %11 = sbr.rel (0) target = $region9
  $region8: #{actor_critic_base_forward.5} parent=0 // pred_region
    _
  $region9: #{actor_critic_base_forward.5} parent=0 // pred_fallthru
    _
  // Predicated region
  $region10: #{actor_critic_base_forward.5} parent=0 // pred_check
    _
  $region11: #{actor_critic_base_forward.5} parent=0 // pred_check_branch
    %13 = sbr.rel (0) target = $region13
  $region12: #{actor_critic_base_forward.5} parent=0 // pred_region
    _
  $region13: #{actor_critic_base_forward.5} parent=0 // pred_fallthru
    _
  %v14 = vld [vmem:[%s0] sm:$0xff]
  %v15 = vld [vmem:[%s0 + $0x8] sm:$0xff]
  %v16 = vld [vmem:[%s0 + $0x10] sm:$0xff]
  %v17 = vld [vmem:[%s0 + $0x18] sm:$0xff]
  %v18 = vld [vmem:[%s0 + $0x20] sm:$0x11]
  %v19 = vld [vmem:[%s0 + $0x28] sm:$0x11]
  %v20 = vld [vmem:[%s1] sm:$0xf]
  %v21 = vld [vmem:[%s1 + $0x4] sm:$0xf]
  %v22 = vld [vmem:[%s1 + $0x8] sm:$0xf]
  %v23 = vld [vmem:[%s1 + $0xc] sm:$0xf]
  %v24 = vld [vmem:[%s1 + $0x10] sm:$0xf]
  %v25 = vld [vmem:[%s1 + $0x14] sm:$0xf]
  %v26 = vld [vmem:[%s1 + $0x18] sm:$0xf]
  %v27 = vld [vmem:[%s1 + $0x1c] sm:$0xf]
  %v28 = vld [vmem:[%s1 + $0x20] sm:$0xf]
  %v29 = vld [vmem:[%s1 + $0x24] sm:$0xf]
  %v30 = vld [vmem:[%s1 + $0x28] sm:$0xf]
  %v31 = vld [vmem:[%s1 + $0x2c] sm:$0xf]
  %v32 = vld [vmem:[%s1 + $0x30] sm:$0xf]
  %v33 = vld [vmem:[%s1 + $0x34] sm:$0xf]
  %v34 = vld [vmem:[%s1 + $0x38] sm:$0xf]
  %v35 = vld [vmem:[%s1 + $0x3c] sm:$0xf]
  %v36 = vld [vmem:[%s1 + $0x40] sm:$0xf]
  %v37 = vld [vmem:[%s1 + $0x44] sm:$0xf]
  %v38 = vld [vmem:[%s1 + $0x48] sm:$0xf]
  %v39 = vld [vmem:[%s1 + $0x4c] sm:$0xf]
  %v40 = vld [vmem:[%s1 + $0x50] sm:$0xf]
  %v41 = vld [vmem:[%s1 + $0x54] sm:$0xf]
  %v42 = vld [vmem:[%s1 + $0x58] sm:$0xf]
  %v43 = vld [vmem:[%s1 + $0x5c] sm:$0xf]
  %v44 = vld [vmem:[%s1 + $0x60] sm:$0xf]
  %v45 = vld [vmem:[%s1 + $0x64] sm:$0xf]
  %v46 = vld [vmem:[%s1 + $0x68] sm:$0xf]
  %v47 = vld [vmem:[%s1 + $0x6c] sm:$0xf]
  %v48 = vld [vmem:[%s1 + $0x70] sm:$0xf]
  %v49 = vld [vmem:[%s1 + $0x74] sm:$0xf]
  %v50 = vld [vmem:[%s1 + $0x78] sm:$0xf]
  %v51 = vld [vmem:[%s1 + $0x7c] sm:$0xf]
  %v52 = vld [vmem:[%s1 + $0x80] sm:$0xf]
  %v53 = vld [vmem:[%s1 + $0x84] sm:$0xf]
  %v54 = vld [vmem:[%s1 + $0x88] sm:$0xf]
  %v55 = vld [vmem:[%s1 + $0x8c] sm:$0xf]
  %v56 = vld [vmem:[%s1 + $0x90] sm:$0xf]
  %v57 = vld [vmem:[%s1 + $0x94] sm:$0xf]
  %v58 = vld [vmem:[%s1 + $0x98] sm:$0xf]
  %v59 = vld [vmem:[%s1 + $0x9c] sm:$0xf]
  %v60 = vld [vmem:[%s1 + $0xa0] sm:$0xf]
  %v61 = vld [vmem:[%s1 + $0xa4] sm:$0xf]
  %v62 = vld [vmem:[%s1 + $0xa8] sm:$0xf]
  %v63 = vld [vmem:[%s1 + $0xac] sm:$0xf]
  %v64 = vld [vmem:[%s1 + $0xb0] sm:$0xf]
  %v65 = vld [vmem:[%s1 + $0xb4] sm:$0xf]
  %v66 = vld [vmem:[%s1 + $0xb8] sm:$0xf]
  %v67 = vld [vmem:[%s1 + $0xbc] sm:$0xf]
  %v68 = vld [vmem:[%s1 + $0xc0] sm:$0xf]
  %v69 = vld [vmem:[%s1 + $0xc4] sm:$0xf]
  %v70 = vld [vmem:[%s1 + $0xc8] sm:$0xf]
  %v71 = vld [vmem:[%s1 + $0xcc] sm:$0xf]
  %v72 = vld [vmem:[%s1 + $0xd0] sm:$0xf]
  %v73 = vld [vmem:[%s1 + $0xd4] sm:$0xf]
  %v74 = vld [vmem:[%s1 + $0xd8] sm:$0xf]
  %v75 = vld [vmem:[%s1 + $0xdc] sm:$0xf]
  %v76 = vld [vmem:[%s1 + $0xe0] sm:$0xf]
  %v77 = vld [vmem:[%s1 + $0xe4] sm:$0xf]
  %v78 = vld [vmem:[%s1 + $0xe8] sm:$0xf]
  %v79 = vld [vmem:[%s1 + $0xec] sm:$0xf]
  %v80 = vld [vmem:[%s1 + $0xf0] sm:$0xf]
  %v81 = vld [vmem:[%s1 + $0xf4] sm:$0xf]
  %v82 = vld [vmem:[%s1 + $0xf8] sm:$0xf]
  %v83 = vld [vmem:[%s1 + $0xfc] sm:$0xf]
  %v84 = vld [vmem:[%s2] sm:$0x1]
  %v86 = vperm.slane %v84, 0
  %v94 = vunpack.c.l.b16 %v14
  %v95 = vunpack.c.h.b16 %v14
  %v96 = vunpack.c.l.b16 %v15
  %v97 = vunpack.c.h.b16 %v15
  %v98 = vunpack.c.l.b16 %v16
  %v99 = vunpack.c.h.b16 %v16
  %v100 = vunpack.c.l.b16 %v17
  %v101 = vunpack.c.h.b16 %v17
  %v102 = vunpack.c.l.b16 %v18
  %v103 = vunpack.c.h.b16 %v18
  %v104 = vunpack.c.l.b16 %v19
  %v105 = vunpack.c.h.b16 %v19
  %v106 = vpack.c.b16 %v98, %v94
  %v107 = vpack.c.b16 %v99, %v95
  %v108 = vpack.c.b16 %v100, %v96
  %v109 = vpack.c.b16 %v101, %v97
  %v110 = vpack.c.b16 %v102, %v102
  %v111 = vpack.c.b16 %v103, %v103
  %v112 = vpack.c.b16 %v104, %v104
  %v113 = vpack.c.b16 %v105, %v105
  %v186 = vunpack.c.l.b16 %v20
  %v187 = vunpack.c.l.b16 %v21
  %v188 = vunpack.c.l.b16 %v22
  %v189 = vunpack.c.l.b16 %v23
  %v190 = vunpack.c.l.b16 %v24
  %v191 = vunpack.c.l.b16 %v25
  %v192 = vunpack.c.l.b16 %v26
  %v193 = vunpack.c.l.b16 %v27
  %v194 = vunpack.c.l.b16 %v28
  %v195 = vunpack.c.l.b16 %v29
  %v196 = vunpack.c.l.b16 %v30
  %v197 = vunpack.c.l.b16 %v31
  %v198 = vunpack.c.l.b16 %v32
  %v199 = vunpack.c.l.b16 %v33
  %v200 = vunpack.c.l.b16 %v34
  %v201 = vunpack.c.l.b16 %v35
  %v202 = vunpack.c.l.b16 %v36
  %v203 = vunpack.c.l.b16 %v37
  %v204 = vunpack.c.l.b16 %v38
  %v205 = vunpack.c.l.b16 %v39
  %v206 = vunpack.c.l.b16 %v40
  %v207 = vunpack.c.l.b16 %v41
  %v208 = vunpack.c.l.b16 %v42
  %v209 = vunpack.c.l.b16 %v43
  %v210 = vunpack.c.l.b16 %v44
  %v211 = vunpack.c.l.b16 %v45
  %v212 = vunpack.c.l.b16 %v46
  %v213 = vunpack.c.l.b16 %v47
  %v214 = vunpack.c.l.b16 %v48
  %v215 = vunpack.c.l.b16 %v49
  %v216 = vunpack.c.l.b16 %v50
  %v217 = vunpack.c.l.b16 %v51
  %v218 = vunpack.c.l.b16 %v52
  %v219 = vunpack.c.l.b16 %v53
  %v220 = vunpack.c.l.b16 %v54
  %v221 = vunpack.c.l.b16 %v55
  %v222 = vunpack.c.l.b16 %v56
  %v223 = vunpack.c.l.b16 %v57
  %v224 = vunpack.c.l.b16 %v58
  %v225 = vunpack.c.l.b16 %v59
  %v226 = vunpack.c.l.b16 %v60
  %v227 = vunpack.c.l.b16 %v61
  %v228 = vunpack.c.l.b16 %v62
  %v229 = vunpack.c.l.b16 %v63
  %v230 = vunpack.c.l.b16 %v64
  %v231 = vunpack.c.l.b16 %v65
  %v232 = vunpack.c.l.b16 %v66
  %v233 = vunpack.c.l.b16 %v67
  %v234 = vunpack.c.l.b16 %v68
  %v235 = vunpack.c.l.b16 %v69
  %v236 = vunpack.c.l.b16 %v70
  %v237 = vunpack.c.l.b16 %v71
  %v238 = vunpack.c.l.b16 %v72
  %v239 = vunpack.c.l.b16 %v73
  %v240 = vunpack.c.l.b16 %v74
  %v241 = vunpack.c.l.b16 %v75
  %v242 = vunpack.c.l.b16 %v76
  %v243 = vunpack.c.l.b16 %v77
  %v244 = vunpack.c.l.b16 %v78
  %v245 = vunpack.c.l.b16 %v79
  %v246 = vunpack.c.l.b16 %v80
  %v247 = vunpack.c.l.b16 %v81
  %v248 = vunpack.c.l.b16 %v82
  %v249 = vunpack.c.l.b16 %v83
  %v250 = vpack.c.b16 %v187, %v186
  %v251 = vpack.c.b16 %v189, %v188
  %v252 = vpack.c.b16 %v191, %v190
  %v253 = vpack.c.b16 %v193, %v192
  %v254 = vpack.c.b16 %v195, %v194
  %v255 = vpack.c.b16 %v197, %v196
  %v256 = vpack.c.b16 %v199, %v198
  %v257 = vpack.c.b16 %v201, %v200
  %v258 = vpack.c.b16 %v203, %v202
  %v259 = vpack.c.b16 %v205, %v204
  %v260 = vpack.c.b16 %v207, %v206
  %v261 = vpack.c.b16 %v209, %v208
  %v262 = vpack.c.b16 %v211, %v210
  %v263 = vpack.c.b16 %v213, %v212
  %v264 = vpack.c.b16 %v215, %v214
  %v265 = vpack.c.b16 %v217, %v216
  %v266 = vpack.c.b16 %v219, %v218
  %v267 = vpack.c.b16 %v221, %v220
  %v268 = vpack.c.b16 %v223, %v222
  %v269 = vpack.c.b16 %v225, %v224
  %v270 = vpack.c.b16 %v227, %v226
  %v271 = vpack.c.b16 %v229, %v228
  %v272 = vpack.c.b16 %v231, %v230
  %v273 = vpack.c.b16 %v233, %v232
  %v274 = vpack.c.b16 %v235, %v234
  %v275 = vpack.c.b16 %v237, %v236
  %v276 = vpack.c.b16 %v239, %v238
  %v277 = vpack.c.b16 %v241, %v240
  %v278 = vpack.c.b16 %v243, %v242
  %v279 = vpack.c.b16 %v245, %v244
  %v280 = vpack.c.b16 %v247, %v246
  %v281 = vpack.c.b16 %v249, %v248
  %314 = vmatpush.bf16.msra.mxu0 %v257
  %315 = vmatpush.bf16.msra.mxu0 %v256
  %316 = vmatpush.bf16.msra.mxu0 %v255
  %317 = vmatpush.bf16.msra.mxu0 %v254
  %318 = vmatpush.bf16.msra.mxu0 %v253
  %319 = vmatpush.bf16.msra.mxu0 %v252
  %320 = vmatpush.bf16.msra.mxu0 %v251
  %321 = vmatpush.bf16.msra.mxu0 %v250
  %322 = vmatmul.bf16.gmra.mxu0 %v106
  %v323 = vpop.f32.mrf.mxu0
  %v324 = vadd.f32 %v86, %v323
  %v325 = vpop.f32.mrf.mxu0
  %v326 = vadd.f32 %v86, %v325
  %327 = vmatmul.bf16.gmra.mxu0 %v110
  %v328 = vpop.f32.mrf.mxu0
  %v329 = vadd.f32 %v86, %v328
  %v330 = vpop.f32.mrf.mxu0
  %331 = vdwg.mxu0
  %332 = vmatpush.bf16.msra.mxu0 %v265
  %333 = vmatpush.bf16.msra.mxu0 %v264
  %334 = vmatpush.bf16.msra.mxu0 %v263
  %335 = vmatpush.bf16.msra.mxu0 %v262
  %336 = vmatpush.bf16.msra.mxu0 %v261
  %337 = vmatpush.bf16.msra.mxu0 %v260
  %338 = vmatpush.bf16.msra.mxu0 %v259
  %339 = vmatpush.bf16.msra.mxu0 %v258
  %340 = vmatmul.bf16.gmra.mxu0 %v107
  %v341 = vpop.f32.mrf.mxu0
  %v342 = vadd.f32 %v324, %v341
  %v343 = vpop.f32.mrf.mxu0
  %v344 = vadd.f32 %v326, %v343
  %345 = vmatmul.bf16.gmra.mxu0 %v111
  %v346 = vpop.f32.mrf.mxu0
  %v347 = vadd.f32 %v329, %v346
  %v348 = vpop.f32.mrf.mxu0
  %349 = vdwg.mxu0
  %350 = vmatpush.bf16.msra.mxu0 %v273
  %351 = vmatpush.bf16.msra.mxu0 %v272
  %352 = vmatpush.bf16.msra.mxu0 %v271
  %353 = vmatpush.bf16.msra.mxu0 %v270
  %354 = vmatpush.bf16.msra.mxu0 %v269
  %355 = vmatpush.bf16.msra.mxu0 %v268
  %356 = vmatpush.bf16.msra.mxu0 %v267
  %357 = vmatpush.bf16.msra.mxu0 %v266
  %358 = vmatmul.bf16.gmra.mxu0 %v108
  %v359 = vpop.f32.mrf.mxu0
  %v360 = vadd.f32 %v342, %v359
  %v361 = vpop.f32.mrf.mxu0
  %v362 = vadd.f32 %v344, %v361
  %363 = vmatmul.bf16.gmra.mxu0 %v112
  %v364 = vpop.f32.mrf.mxu0
  %v365 = vadd.f32 %v347, %v364
  %v366 = vpop.f32.mrf.mxu0
  %367 = vdwg.mxu0
  %368 = vmatpush.bf16.msra.mxu0 %v281
  %369 = vmatpush.bf16.msra.mxu0 %v280
  %370 = vmatpush.bf16.msra.mxu0 %v279
  %371 = vmatpush.bf16.msra.mxu0 %v278
  %372 = vmatpush.bf16.msra.mxu0 %v277
  %373 = vmatpush.bf16.msra.mxu0 %v276
  %374 = vmatpush.bf16.msra.mxu0 %v275
  %375 = vmatpush.bf16.msra.mxu0 %v274
  %376 = vmatmul.bf16.gmra.mxu0 %v109
  %v377 = vpop.f32.mrf.mxu0
  %v378 = vadd.f32 %v360, %v377
  %v379 = vpop.f32.mrf.mxu0
  %v380 = vadd.f32 %v362, %v379
  %381 = vmatmul.bf16.gmra.mxu0 %v113
  %v382 = vpop.f32.mrf.mxu0
  %v383 = vadd.f32 %v365, %v382
  %v384 = vpop.f32.mrf.mxu0
  %385 = vdwg.mxu0
  %v386 = vmax.f32 %v378, 0.0
  %v387 = vmax.f32 %v380, 0.0
  %v388 = vmax.f32 %v383, 0.0
  %v389 = vpack.c.bf16 %v386, %v386
  %v390 = vpack.c.bf16 %v387, %v387
  %v391 = vpack.c.bf16 %v388, %v388
  %vm392 = vcmask 519168
  %393 = vst.msk [vmem:[%s3] sm:$0xf] %vm392, %v389
  %394 = vst.msk [vmem:[%s3 + $0x4] sm:$0xf] %vm392, %v390
  %vm395 = vcmask 516096
  %396 = vst.msk [vmem:[%s3 + $0x8] sm:$0x1] %vm395, %v391
  // Predicated region
  $region14: #{actor_critic_base_forward.5} parent=0 // pred_check
    _
  $region15: #{actor_critic_base_forward.5} parent=0 // pred_check_branch
    %398 = sbr.rel (0) target = $region17
  $region16: #{actor_critic_base_forward.5} parent=0 // pred_region
    _
  $region17: #{actor_critic_base_forward.5} parent=0 // pred_fallthru
    _
  // Predicated region
  $region18: #{actor_critic_base_forward.5} parent=0 // pred_check
    _
  $region19: #{actor_critic_base_forward.5} parent=0 // pred_check_branch
    %400 = sbr.rel (0) target = $region21
  $region20: #{actor_critic_base_forward.5} parent=0 // pred_region
    _
  $region21: #{actor_critic_base_forward.5} parent=0 // pred_fallthru
    _

// kernel: actor_critic_base_forward.6
$region0: #{actor_critic_base_forward.6}
  #allocation0 [shape = 'u32[]', space=smem, size = 0x4, offset = 0x4, fixed_abs, tag = 'smem constant byte address 0x4 - core index']
  #allocation1 [shape = 'u32[72,128]{1,0:T(1,128)}', space=vmem, size = 0x9000, scoped, tag = 'internal scratch']
  %s0 = inlined_call_operand.vmem [shape: bf16[2,576], index: 0, kind: input, shape index: {}]
  %s1 = inlined_call_operand.vmem [shape: bf16[576,32], index: 1, kind: input, shape index: {}]
  %s2 = inlined_call_operand.vmem [shape: f32[1,32], index: 2, kind: input, shape index: {}]
  %s3 = inlined_call_operand.vmem [shape: bf16[2,32], index: 3, kind: output, shape index: {}]
  %s4 = sld [smem:[#allocation0]]
  $region22: #{actor_critic_base_forward.6} parent=0
    _
  %s6 = ssub.s32 1, %s4
  %s7 = scalar_select 0, %s6, %s4
  // Predicated region
  $region2: #{actor_critic_base_forward.6} parent=0 // pred_check
    _
  $region3: #{actor_critic_base_forward.6} parent=0 // pred_check_branch
    %9 = sbr.rel (0) target = $region5
  $region4: #{actor_critic_base_forward.6} parent=0 // pred_region
    _
  $region5: #{actor_critic_base_forward.6} parent=0 // pred_fallthru
    _
  // Predicated region
  $region6: #{actor_critic_base_forward.6} parent=0 // pred_check
    _
  $region7: #{actor_critic_base_forward.6} parent=0 // pred_check_branch
    %11 = sbr.rel (0) target = $region9
  $region8: #{actor_critic_base_forward.6} parent=0 // pred_region
    _
  $region9: #{actor_critic_base_forward.6} parent=0 // pred_fallthru
    _
  // Predicated region
  $region10: #{actor_critic_base_forward.6} parent=0 // pred_check
    _
  $region11: #{actor_critic_base_forward.6} parent=0 // pred_check_branch
    %13 = sbr.rel (0) target = $region13
  $region12: #{actor_critic_base_forward.6} parent=0 // pred_region
    _
  $region13: #{actor_critic_base_forward.6} parent=0 // pred_fallthru
    _
  %v15 = vld [vmem:[%s0] sm:$0x1f]
  %v16 = vld [vmem:[%s1] sm:$0xf]
  %v17 = vld [vmem:[%s1 + $0x4] sm:$0xf]
  %v18 = vld [vmem:[%s1 + $0x8] sm:$0xf]
  %v19 = vld [vmem:[%s1 + $0xc] sm:$0xf]
  %v20 = vld [vmem:[%s1 + $0x10] sm:$0xf]
  %v21 = vld [vmem:[%s1 + $0x14] sm:$0xf]
  %v22 = vld [vmem:[%s1 + $0x18] sm:$0xf]
  %v23 = vld [vmem:[%s1 + $0x1c] sm:$0xf]
  %v24 = vld [vmem:[%s1 + $0x20] sm:$0xf]
  %v25 = vld [vmem:[%s1 + $0x24] sm:$0xf]
  %v26 = vld [vmem:[%s1 + $0x28] sm:$0xf]
  %v27 = vld [vmem:[%s1 + $0x2c] sm:$0xf]
  %v28 = vld [vmem:[%s1 + $0x30] sm:$0xf]
  %v29 = vld [vmem:[%s1 + $0x34] sm:$0xf]
  %v30 = vld [vmem:[%s1 + $0x38] sm:$0xf]
  %v31 = vld [vmem:[%s1 + $0x3c] sm:$0xf]
  %v32 = vld [vmem:[%s1 + $0x40] sm:$0xf]
  %v33 = vld [vmem:[%s1 + $0x44] sm:$0xf]
  %v34 = vld [vmem:[%s1 + $0x48] sm:$0xf]
  %v35 = vld [vmem:[%s1 + $0x4c] sm:$0xf]
  %v36 = vld [vmem:[%s1 + $0x50] sm:$0xf]
  %v37 = vld [vmem:[%s1 + $0x54] sm:$0xf]
  %v38 = vld [vmem:[%s1 + $0x58] sm:$0xf]
  %v39 = vld [vmem:[%s1 + $0x5c] sm:$0xf]
  %v40 = vld [vmem:[%s1 + $0x60] sm:$0xf]
  %v41 = vld [vmem:[%s1 + $0x64] sm:$0xf]
  %v42 = vld [vmem:[%s1 + $0x68] sm:$0xf]
  %v43 = vld [vmem:[%s1 + $0x6c] sm:$0xf]
  %v44 = vld [vmem:[%s1 + $0x70] sm:$0xf]
  %v45 = vld [vmem:[%s1 + $0x74] sm:$0xf]
  %v46 = vld [vmem:[%s1 + $0x78] sm:$0xf]
  %v47 = vld [vmem:[%s1 + $0x7c] sm:$0xf]
  %v48 = vld [vmem:[%s1 + $0x80] sm:$0xf]
  %v49 = vld [vmem:[%s1 + $0x84] sm:$0xf]
  %v50 = vld [vmem:[%s1 + $0x88] sm:$0xf]
  %v51 = vld [vmem:[%s1 + $0x8c] sm:$0xf]
  %v52 = vld [vmem:[%s1 + $0x90] sm:$0xf]
  %v53 = vld [vmem:[%s1 + $0x94] sm:$0xf]
  %v54 = vld [vmem:[%s1 + $0x98] sm:$0xf]
  %v55 = vld [vmem:[%s1 + $0x9c] sm:$0xf]
  %v56 = vld [vmem:[%s1 + $0xa0] sm:$0xf]
  %v57 = vld [vmem:[%s1 + $0xa4] sm:$0xf]
  %v58 = vld [vmem:[%s1 + $0xa8] sm:$0xf]
  %v59 = vld [vmem:[%s1 + $0xac] sm:$0xf]
  %v60 = vld [vmem:[%s1 + $0xb0] sm:$0xf]
  %v61 = vld [vmem:[%s1 + $0xb4] sm:$0xf]
  %v62 = vld [vmem:[%s1 + $0xb8] sm:$0xf]
  %v63 = vld [vmem:[%s1 + $0xbc] sm:$0xf]
  %v64 = vld [vmem:[%s1 + $0xc0] sm:$0xf]
  %v65 = vld [vmem:[%s1 + $0xc4] sm:$0xf]
  %v66 = vld [vmem:[%s1 + $0xc8] sm:$0xf]
  %v67 = vld [vmem:[%s1 + $0xcc] sm:$0xf]
  %v68 = vld [vmem:[%s1 + $0xd0] sm:$0xf]
  %v69 = vld [vmem:[%s1 + $0xd4] sm:$0xf]
  %v70 = vld [vmem:[%s1 + $0xd8] sm:$0xf]
  %v71 = vld [vmem:[%s1 + $0xdc] sm:$0xf]
  %v72 = vld [vmem:[%s1 + $0xe0] sm:$0xf]
  %v73 = vld [vmem:[%s1 + $0xe4] sm:$0xf]
  %v74 = vld [vmem:[%s1 + $0xe8] sm:$0xf]
  %v75 = vld [vmem:[%s1 + $0xec] sm:$0xf]
  %v76 = vld [vmem:[%s1 + $0xf0] sm:$0xf]
  %v77 = vld [vmem:[%s1 + $0xf4] sm:$0xf]
  %v78 = vld [vmem:[%s1 + $0xf8] sm:$0xf]
  %v79 = vld [vmem:[%s1 + $0xfc] sm:$0xf]
  %v80 = vld [vmem:[%s1 + $0x100] sm:$0xf]
  %v81 = vld [vmem:[%s1 + $0x104] sm:$0xf]
  %v82 = vld [vmem:[%s1 + $0x108] sm:$0xf]
  %v83 = vld [vmem:[%s1 + $0x10c] sm:$0xf]
  %v84 = vld [vmem:[%s1 + $0x110] sm:$0xf]
  %v85 = vld [vmem:[%s1 + $0x114] sm:$0xf]
  %v86 = vld [vmem:[%s1 + $0x118] sm:$0xf]
  %v87 = vld [vmem:[%s1 + $0x11c] sm:$0xf]
  %v88 = vld [vmem:[%s2] sm:$0x1]
  %v90 = vperm.slane %v88, 0
  %93 = vst [vmem:[#allocation1] ss:$9 sm:$0xff] %v15
  %v94 = vld [vmem:[#allocation1] sm:$0xff]
  %v95 = vld [vmem:[#allocation1 + $0x9] sm:$0xff]
  %v96 = vld [vmem:[#allocation1 + $0x12] sm:$0xff]
  %v97 = vld [vmem:[#allocation1 + $0x1b] sm:$0xff]
  %v98 = vld [vmem:[#allocation1 + $0x24] sm:$0xff]
  %v175 = vunpack.c.l.b16 %v16
  %v176 = vunpack.c.l.b16 %v17
  %v177 = vunpack.c.l.b16 %v18
  %v178 = vunpack.c.l.b16 %v19
  %v179 = vunpack.c.l.b16 %v20
  %v180 = vunpack.c.l.b16 %v21
  %v181 = vunpack.c.l.b16 %v22
  %v182 = vunpack.c.l.b16 %v23
  %v183 = vunpack.c.l.b16 %v24
  %v184 = vunpack.c.l.b16 %v25
  %v185 = vunpack.c.l.b16 %v26
  %v186 = vunpack.c.l.b16 %v27
  %v187 = vunpack.c.l.b16 %v28
  %v188 = vunpack.c.l.b16 %v29
  %v189 = vunpack.c.l.b16 %v30
  %v190 = vunpack.c.l.b16 %v31
  %v191 = vunpack.c.l.b16 %v32
  %v192 = vunpack.c.l.b16 %v33
  %v193 = vunpack.c.l.b16 %v34
  %v194 = vunpack.c.l.b16 %v35
  %v195 = vunpack.c.l.b16 %v36
  %v196 = vunpack.c.l.b16 %v37
  %v197 = vunpack.c.l.b16 %v38
  %v198 = vunpack.c.l.b16 %v39
  %v199 = vunpack.c.l.b16 %v40
  %v200 = vunpack.c.l.b16 %v41
  %v201 = vunpack.c.l.b16 %v42
  %v202 = vunpack.c.l.b16 %v43
  %v203 = vunpack.c.l.b16 %v44
  %v204 = vunpack.c.l.b16 %v45
  %v205 = vunpack.c.l.b16 %v46
  %v206 = vunpack.c.l.b16 %v47
  %v207 = vunpack.c.l.b16 %v48
  %v208 = vunpack.c.l.b16 %v49
  %v209 = vunpack.c.l.b16 %v50
  %v210 = vunpack.c.l.b16 %v51
  %v211 = vunpack.c.l.b16 %v52
  %v212 = vunpack.c.l.b16 %v53
  %v213 = vunpack.c.l.b16 %v54
  %v214 = vunpack.c.l.b16 %v55
  %v215 = vunpack.c.l.b16 %v56
  %v216 = vunpack.c.l.b16 %v57
  %v217 = vunpack.c.l.b16 %v58
  %v218 = vunpack.c.l.b16 %v59
  %v219 = vunpack.c.l.b16 %v60
  %v220 = vunpack.c.l.b16 %v61
  %v221 = vunpack.c.l.b16 %v62
  %v222 = vunpack.c.l.b16 %v63
  %v223 = vunpack.c.l.b16 %v64
  %v224 = vunpack.c.l.b16 %v65
  %v225 = vunpack.c.l.b16 %v66
  %v226 = vunpack.c.l.b16 %v67
  %v227 = vunpack.c.l.b16 %v68
  %v228 = vunpack.c.l.b16 %v69
  %v229 = vunpack.c.l.b16 %v70
  %v230 = vunpack.c.l.b16 %v71
  %v231 = vunpack.c.l.b16 %v72
  %v232 = vunpack.c.l.b16 %v73
  %v233 = vunpack.c.l.b16 %v74
  %v234 = vunpack.c.l.b16 %v75
  %v235 = vunpack.c.l.b16 %v76
  %v236 = vunpack.c.l.b16 %v77
  %v237 = vunpack.c.l.b16 %v78
  %v238 = vunpack.c.l.b16 %v79
  %v239 = vunpack.c.l.b16 %v80
  %v240 = vunpack.c.l.b16 %v81
  %v241 = vunpack.c.l.b16 %v82
  %v242 = vunpack.c.l.b16 %v83
  %v243 = vunpack.c.l.b16 %v84
  %v244 = vunpack.c.l.b16 %v85
  %v245 = vunpack.c.l.b16 %v86
  %v246 = vunpack.c.l.b16 %v87
  %v247 = vpack.c.b16 %v176, %v175
  %v248 = vpack.c.b16 %v178, %v177
  %v249 = vpack.c.b16 %v180, %v179
  %v250 = vpack.c.b16 %v182, %v181
  %v251 = vpack.c.b16 %v184, %v183
  %v252 = vpack.c.b16 %v186, %v185
  %v253 = vpack.c.b16 %v188, %v187
  %v254 = vpack.c.b16 %v190, %v189
  %v255 = vpack.c.b16 %v192, %v191
  %v256 = vpack.c.b16 %v194, %v193
  %v257 = vpack.c.b16 %v196, %v195
  %v258 = vpack.c.b16 %v198, %v197
  %v259 = vpack.c.b16 %v200, %v199
  %v260 = vpack.c.b16 %v202, %v201
  %v261 = vpack.c.b16 %v204, %v203
  %v262 = vpack.c.b16 %v206, %v205
  %v263 = vpack.c.b16 %v208, %v207
  %v264 = vpack.c.b16 %v210, %v209
  %v265 = vpack.c.b16 %v212, %v211
  %v266 = vpack.c.b16 %v214, %v213
  %v267 = vpack.c.b16 %v216, %v215
  %v268 = vpack.c.b16 %v218, %v217
  %v269 = vpack.c.b16 %v220, %v219
  %v270 = vpack.c.b16 %v222, %v221
  %v271 = vpack.c.b16 %v224, %v223
  %v272 = vpack.c.b16 %v226, %v225
  %v273 = vpack.c.b16 %v228, %v227
  %v274 = vpack.c.b16 %v230, %v229
  %v275 = vpack.c.b16 %v232, %v231
  %v276 = vpack.c.b16 %v234, %v233
  %v277 = vpack.c.b16 %v236, %v235
  %v278 = vpack.c.b16 %v238, %v237
  %v279 = vpack.c.b16 %v240, %v239
  %v280 = vpack.c.b16 %v242, %v241
  %v281 = vpack.c.b16 %v244, %v243
  %v282 = vpack.c.b16 %v246, %v245
  %vm319 = vcmask 523264
  %v320 = vsel %vm319, %v98, 0
  %322 = vmatpush.bf16.msra.mxu0 %v254
  %323 = vmatpush.bf16.msra.mxu0 %v253
  %324 = vmatpush.bf16.msra.mxu0 %v252
  %325 = vmatpush.bf16.msra.mxu0 %v251
  %326 = vmatpush.bf16.msra.mxu0 %v250
  %327 = vmatpush.bf16.msra.mxu0 %v249
  %328 = vmatpush.bf16.msra.mxu0 %v248
  %329 = vmatpush.bf16.msra.mxu0 %v247
  %330 = vmatmul.bf16.gmra.mxu0 %v94
  %v331 = vpop.f32.mrf.mxu0
  %v332 = vadd.f32 %v90, %v331
  %v333 = vpop.f32.mrf.mxu0
  %334 = vdwg.mxu0
  %335 = vmatpush.bf16.msra.mxu0 %v262
  %336 = vmatpush.bf16.msra.mxu0 %v261
  %337 = vmatpush.bf16.msra.mxu0 %v260
  %338 = vmatpush.bf16.msra.mxu0 %v259
  %339 = vmatpush.bf16.msra.mxu0 %v258
  %340 = vmatpush.bf16.msra.mxu0 %v257
  %341 = vmatpush.bf16.msra.mxu0 %v256
  %342 = vmatpush.bf16.msra.mxu0 %v255
  %343 = vmatmul.bf16.gmra.mxu0 %v95
  %v344 = vpop.f32.mrf.mxu0
  %v345 = vadd.f32 %v332, %v344
  %v346 = vpop.f32.mrf.mxu0
  %347 = vdwg.mxu0
  %348 = vmatpush.bf16.msra.mxu0 %v270
  %349 = vmatpush.bf16.msra.mxu0 %v269
  %350 = vmatpush.bf16.msra.mxu0 %v268
  %351 = vmatpush.bf16.msra.mxu0 %v267
  %352 = vmatpush.bf16.msra.mxu0 %v266
  %353 = vmatpush.bf16.msra.mxu0 %v265
  %354 = vmatpush.bf16.msra.mxu0 %v264
  %355 = vmatpush.bf16.msra.mxu0 %v263
  %356 = vmatmul.bf16.gmra.mxu0 %v96
  %v357 = vpop.f32.mrf.mxu0
  %v358 = vadd.f32 %v345, %v357
  %v359 = vpop.f32.mrf.mxu0
  %360 = vdwg.mxu0
  %361 = vmatpush.bf16.msra.mxu0 %v278
  %362 = vmatpush.bf16.msra.mxu0 %v277
  %363 = vmatpush.bf16.msra.mxu0 %v276
  %364 = vmatpush.bf16.msra.mxu0 %v275
  %365 = vmatpush.bf16.msra.mxu0 %v274
  %366 = vmatpush.bf16.msra.mxu0 %v273
  %367 = vmatpush.bf16.msra.mxu0 %v272
  %368 = vmatpush.bf16.msra.mxu0 %v271
  %369 = vmatmul.bf16.gmra.mxu0 %v97
  %v370 = vpop.f32.mrf.mxu0
  %v371 = vadd.f32 %v358, %v370
  %v372 = vpop.f32.mrf.mxu0
  %373 = vdwg.mxu0
  %374 = vmatpush.bf16.msra.mxu0 0
  %375 = vmatpush.bf16.msra.mxu0 0
  %376 = vmatpush.bf16.msra.mxu0 0
  %377 = vmatpush.bf16.msra.mxu0 0
  %378 = vmatpush.bf16.msra.mxu0 %v282
  %379 = vmatpush.bf16.msra.mxu0 %v281
  %380 = vmatpush.bf16.msra.mxu0 %v280
  %381 = vmatpush.bf16.msra.mxu0 %v279
  %382 = vmatmul.bf16.gmra.mxu0 %v320
  %v383 = vpop.f32.mrf.mxu0
  %v384 = vadd.f32 %v371, %v383
  %v385 = vpop.f32.mrf.mxu0
  %386 = vdwg.mxu0
  %v387 = vmax.f32 %v384, 0.0
  %v388 = vpack.c.bf16 %v387, %v387
  %vm389 = vcmask 253952
  %390 = vst.msk [vmem:[%s3] sm:$0x1] %vm389, %v388
  // Predicated region
  $region14: #{actor_critic_base_forward.6} parent=0 // pred_check
    _
  $region15: #{actor_critic_base_forward.6} parent=0 // pred_check_branch
    %392 = sbr.rel (0) target = $region17
  $region16: #{actor_critic_base_forward.6} parent=0 // pred_region
    _
  $region17: #{actor_critic_base_forward.6} parent=0 // pred_fallthru
    _
  // Predicated region
  $region18: #{actor_critic_base_forward.6} parent=0 // pred_check
    _
  $region19: #{actor_critic_base_forward.6} parent=0 // pred_check_branch
    %394 = sbr.rel (0) target = $region21
  $region20: #{actor_critic_base_forward.6} parent=0 // pred_region
    _
  $region21: #{actor_critic_base_forward.6} parent=0 // pred_fallthru
    _

// kernel: actor_critic_base_forward.7
$region0: #{actor_critic_base_forward.7}
  #allocation0 [shape = 'u32[]', space=smem, size = 0x4, offset = 0x4, fixed_abs, tag = 'smem constant byte address 0x4 - core index']
  #allocation1 [shape = 'u32[72,128]{1,0:T(1,128)}', space=vmem, size = 0x9000, scoped, tag = 'internal scratch']
  #allocation2 [shape = 'f32[1,1]{1,0:T(1,128)S(1)}', space=vmem, size = 0x200, scoped, tag = 'scoped memory for actor_critic_base_forward.7']
  %s0 = inlined_call_operand.vmem [shape: bf16[2,32], index: 0, kind: input, shape index: {}]
  %s1 = inlined_call_operand.vmem [shape: bf16[32,512], index: 1, kind: input, shape index: {}]
  %s2 = inlined_call_operand.vmem [shape: f32[1,512], index: 2, kind: input, shape index: {}]
  %s3 = inlined_call_operand.vmem [shape: f32[512,1], index: 3, kind: input, shape index: {}]
  %s4 = inlined_call_operand.<no memory space> [shape: f32[1,1], index: 4, kind: input, shape index: {}]
  %s5 = inlined_call_operand.hbm [shape: f32[2,512], index: 5, kind: output, shape index: {0}]
  %s6 = inlined_call_operand.vmem [shape: f32[2,1], index: 6, kind: output, shape index: {1}]
  %7 = xla_tuple %s5, %s6
  %s8 = sld [smem:[#allocation0]]
  $region38: #{actor_critic_base_forward.7} parent=0
    _
  %s10 = ssub.s32 1, %s8
  %s11 = scalar_select 0, %s10, %s8
  %v12 = vstv %s4
  %13 = vst [vmem:[#allocation2] sm:$0x1] %v12
  $region1: #{actor_critic_base_forward.7} parent=0
    #allocation3 [shape = 'u8[4096]{0}', space=vmem, size = 0x1000, scoped, tag = 'output window, operand 0, single buffered']
    #allocation4 [shape = 's32[1]{0}', space=sflag, size = 0x4, scoped, tag = 'scoped memory for actor_critic_base_forward.7']
    %14 = vsyncpa [#allocation4], 0
    // Predicated region
    $region2: #{actor_critic_base_forward.7} parent=1 // pred_check
      _
    $region3: #{actor_critic_base_forward.7} parent=1 // pred_check_branch
      %16 = sbr.rel (0) target = $region5
    $region4: #{actor_critic_base_forward.7} parent=1 // pred_region
      _
    $region5: #{actor_critic_base_forward.7} parent=1 // pred_fallthru
      _
    // Predicated region
    $region6: #{actor_critic_base_forward.7} parent=1 // pred_check
      _
    $region7: #{actor_critic_base_forward.7} parent=1 // pred_check_branch
      %18 = sbr.rel (0) target = $region9
    $region8: #{actor_critic_base_forward.7} parent=1 // pred_region
      _
    $region9: #{actor_critic_base_forward.7} parent=1 // pred_fallthru
      _
    // Predicated region
    $region10: #{actor_critic_base_forward.7} parent=1 // pred_check
      _
    $region11: #{actor_critic_base_forward.7} parent=1 // pred_check_branch
      %20 = sbr.rel (0) target = $region13
    $region12: #{actor_critic_base_forward.7} parent=1 // pred_region
      _
    $region13: #{actor_critic_base_forward.7} parent=1 // pred_fallthru
      _
    // Predicated region
    $region14: #{actor_critic_base_forward.7} parent=1 // pred_check
      _
    $region15: #{actor_critic_base_forward.7} parent=1 // pred_check_branch
      %22 = sbr.rel (0) target = $region17
    $region16: #{actor_critic_base_forward.7} parent=1 // pred_region
      _
    $region17: #{actor_critic_base_forward.7} parent=1 // pred_fallthru
      _
    // Predicated region
    $region18: #{actor_critic_base_forward.7} parent=1 // pred_check
      _
    $region19: #{actor_critic_base_forward.7} parent=1 // pred_check_branch
      %24 = sbr.rel (0) target = $region21
    $region20: #{actor_critic_base_forward.7} parent=1 // pred_region
      _
    $region21: #{actor_critic_base_forward.7} parent=1 // pred_fallthru
      _
    %v26 = vld [vmem:[%s0] sm:$0x1]
    %v27 = vld [vmem:[%s1] sm:$0xff]
    %v28 = vld [vmem:[%s1 + $0x8] sm:$0xff]
    %v29 = vld [vmem:[%s1 + $0x10] sm:$0xff]
    %v30 = vld [vmem:[%s1 + $0x18] sm:$0xff]
    %v31 = vld [vmem:[%s1 + $0x20] sm:$0xff]
    %v32 = vld [vmem:[%s1 + $0x28] sm:$0xff]
    %v33 = vld [vmem:[%s1 + $0x30] sm:$0xff]
    %v34 = vld [vmem:[%s1 + $0x38] sm:$0xff]
    %v35 = vld [vmem:[%s2] sm:$0xf]
    %v37 = vperm.slane %v35, 0
    %v38 = vperm.slane %v35, 1
    %v39 = vperm.slane %v35, 2
    %v40 = vperm.slane %v35, 3
    %v53 = vunpack.c.l.b16 %v27
    %v54 = vunpack.c.h.b16 %v27
    %v55 = vunpack.c.l.b16 %v28
    %v56 = vunpack.c.h.b16 %v28
    %v57 = vunpack.c.l.b16 %v29
    %v58 = vunpack.c.h.b16 %v29
    %v59 = vunpack.c.l.b16 %v30
    %v60 = vunpack.c.h.b16 %v30
    %v61 = vunpack.c.l.b16 %v31
    %v62 = vunpack.c.h.b16 %v31
    %v63 = vunpack.c.l.b16 %v32
    %v64 = vunpack.c.h.b16 %v32
    %v65 = vunpack.c.l.b16 %v33
    %v66 = vunpack.c.h.b16 %v33
    %v67 = vunpack.c.l.b16 %v34
    %v68 = vunpack.c.h.b16 %v34
    %v69 = vpack.c.b16 %v57, %v53
    %v70 = vpack.c.b16 %v58, %v54
    %v71 = vpack.c.b16 %v59, %v55
    %v72 = vpack.c.b16 %v60, %v56
    %v73 = vpack.c.b16 %v65, %v61
    %v74 = vpack.c.b16 %v66, %v62
    %v75 = vpack.c.b16 %v67, %v63
    %v76 = vpack.c.b16 %v68, %v64
    %vm85 = vcmask 261120
    %v87 = vsel %vm85, %v26, 0
    %89 = vmatpush.bf16.msra.mxu0 0
    %90 = vmatpush.bf16.msra.mxu0 0
    %91 = vmatpush.bf16.msra.mxu0 0
    %92 = vmatpush.bf16.msra.mxu0 0
    %93 = vmatpush.bf16.msra.mxu0 0
    %94 = vmatpush.bf16.msra.mxu0 0
    %95 = vmatpush.bf16.msra.mxu0 %v73
    %96 = vmatpush.bf16.msra.mxu0 %v69
    %97 = vmatmul.bf16.gmra.mxu0 %v87
    %v98 = vpop.f32.mrf.mxu0
    %v99 = vadd.f32 %v37, %v98
    %v100 = vpop.f32.mrf.mxu0
    %101 = vdwg.mxu0
    %102 = vmatpush.bf16.msra.mxu0 0
    %103 = vmatpush.bf16.msra.mxu0 0
    %104 = vmatpush.bf16.msra.mxu0 0
    %105 = vmatpush.bf16.msra.mxu0 0
    %106 = vmatpush.bf16.msra.mxu0 0
    %107 = vmatpush.bf16.msra.mxu0 0
    %108 = vmatpush.bf16.msra.mxu0 %v74
    %109 = vmatpush.bf16.msra.mxu0 %v70
    %110 = vmatmul.bf16.gmra.mxu0 %v87
    %v111 = vpop.f32.mrf.mxu0
    %v112 = vadd.f32 %v38, %v111
    %v113 = vpop.f32.mrf.mxu0
    %114 = vdwg.mxu0
    %115 = vmatpush.bf16.msra.mxu0 0
    %116 = vmatpush.bf16.msra.mxu0 0
    %117 = vmatpush.bf16.msra.mxu0 0
    %118 = vmatpush.bf16.msra.mxu0 0
    %119 = vmatpush.bf16.msra.mxu0 0
    %120 = vmatpush.bf16.msra.mxu0 0
    %121 = vmatpush.bf16.msra.mxu0 %v75
    %122 = vmatpush.bf16.msra.mxu0 %v71
    %123 = vmatmul.bf16.gmra.mxu0 %v87
    %v124 = vpop.f32.mrf.mxu0
    %v125 = vadd.f32 %v39, %v124
    %v126 = vpop.f32.mrf.mxu0
    %127 = vdwg.mxu0
    %128 = vmatpush.bf16.msra.mxu0 0
    %129 = vmatpush.bf16.msra.mxu0 0
    %130 = vmatpush.bf16.msra.mxu0 0
    %131 = vmatpush.bf16.msra.mxu0 0
    %132 = vmatpush.bf16.msra.mxu0 0
    %133 = vmatpush.bf16.msra.mxu0 0
    %134 = vmatpush.bf16.msra.mxu0 %v76
    %135 = vmatpush.bf16.msra.mxu0 %v72
    %136 = vmatmul.bf16.gmra.mxu0 %v87
    %v137 = vpop.f32.mrf.mxu0
    %v138 = vadd.f32 %v40, %v137
    %v139 = vpop.f32.mrf.mxu0
    %140 = vdwg.mxu0
    %v141 = vmax.f32 %v99, 0.0
    %v142 = vmax.f32 %v112, 0.0
    %v143 = vmax.f32 %v125, 0.0
    %v144 = vmax.f32 %v138, 0.0
    %v149 = vrot.slane %v142, 6
    %v150 = vrot.slane %v143, 4
    %v151 = vrot.slane %v144, 2
    %vm152 = vcmask 1041408
    %v153 = vsel %vm152, %v141, %v149
    %vm154 = vcmask 1045508
    %v155 = vsel %vm154, %v150, %v151
    %vm156 = vcmask 1043456
    %v157 = vsel %vm156, %v153, %v155
    %159 = vst [vmem:[#allocation3] sm:$0xff] %v157
    %v160 = vld [vmem:[%s3] sm:$0xff]
    %v161 = vld [vmem:[%s3 + $0x8] sm:$0xff]
    %v162 = vld [vmem:[%s3 + $0x10] sm:$0xff]
    %v163 = vld [vmem:[%s3 + $0x18] sm:$0xff]
    %v164 = vld [vmem:[%s3 + $0x20] sm:$0xff]
    %v165 = vld [vmem:[%s3 + $0x28] sm:$0xff]
    %v166 = vld [vmem:[%s3 + $0x30] sm:$0xff]
    %v167 = vld [vmem:[%s3 + $0x38] sm:$0xff]
    %v168 = vld [vmem:[%s3 + $0x40] sm:$0xff]
    %v169 = vld [vmem:[%s3 + $0x48] sm:$0xff]
    %v170 = vld [vmem:[%s3 + $0x50] sm:$0xff]
    %v171 = vld [vmem:[%s3 + $0x58] sm:$0xff]
    %v172 = vld [vmem:[%s3 + $0x60] sm:$0xff]
    %v173 = vld [vmem:[%s3 + $0x68] sm:$0xff]
    %v174 = vld [vmem:[%s3 + $0x70] sm:$0xff]
    %v175 = vld [vmem:[%s3 + $0x78] sm:$0xff]
    %v176 = vld [vmem:[%s3 + $0x80] sm:$0xff]
    %v177 = vld [vmem:[%s3 + $0x88] sm:$0xff]
    %v178 = vld [vmem:[%s3 + $0x90] sm:$0xff]
    %v179 = vld [vmem:[%s3 + $0x98] sm:$0xff]
    %v180 = vld [vmem:[%s3 + $0xa0] sm:$0xff]
    %v181 = vld [vmem:[%s3 + $0xa8] sm:$0xff]
    %v182 = vld [vmem:[%s3 + $0xb0] sm:$0xff]
    %v183 = vld [vmem:[%s3 + $0xb8] sm:$0xff]
    %v184 = vld [vmem:[%s3 + $0xc0] sm:$0xff]
    %v185 = vld [vmem:[%s3 + $0xc8] sm:$0xff]
    %v186 = vld [vmem:[%s3 + $0xd0] sm:$0xff]
    %v187 = vld [vmem:[%s3 + $0xd8] sm:$0xff]
    %v188 = vld [vmem:[%s3 + $0xe0] sm:$0xff]
    %v189 = vld [vmem:[%s3 + $0xe8] sm:$0xff]
    %v190 = vld [vmem:[%s3 + $0xf0] sm:$0xff]
    %v191 = vld [vmem:[%s3 + $0xf8] sm:$0xff]
    %v192 = vld [vmem:[%s3 + $0x100] sm:$0xff]
    %v193 = vld [vmem:[%s3 + $0x108] sm:$0xff]
    %v194 = vld [vmem:[%s3 + $0x110] sm:$0xff]
    %v195 = vld [vmem:[%s3 + $0x118] sm:$0xff]
    %v196 = vld [vmem:[%s3 + $0x120] sm:$0xff]
    %v197 = vld [vmem:[%s3 + $0x128] sm:$0xff]
    %v198 = vld [vmem:[%s3 + $0x130] sm:$0xff]
    %v199 = vld [vmem:[%s3 + $0x138] sm:$0xff]
    %v200 = vld [vmem:[%s3 + $0x140] sm:$0xff]
    %v201 = vld [vmem:[%s3 + $0x148] sm:$0xff]
    %v202 = vld [vmem:[%s3 + $0x150] sm:$0xff]
    %v203 = vld [vmem:[%s3 + $0x158] sm:$0xff]
    %v204 = vld [vmem:[%s3 + $0x160] sm:$0xff]
    %v205 = vld [vmem:[%s3 + $0x168] sm:$0xff]
    %v206 = vld [vmem:[%s3 + $0x170] sm:$0xff]
    %v207 = vld [vmem:[%s3 + $0x178] sm:$0xff]
    %v208 = vld [vmem:[%s3 + $0x180] sm:$0xff]
    %v209 = vld [vmem:[%s3 + $0x188] sm:$0xff]
    %v210 = vld [vmem:[%s3 + $0x190] sm:$0xff]
    %v211 = vld [vmem:[%s3 + $0x198] sm:$0xff]
    %v212 = vld [vmem:[%s3 + $0x1a0] sm:$0xff]
    %v213 = vld [vmem:[%s3 + $0x1a8] sm:$0xff]
    %v214 = vld [vmem:[%s3 + $0x1b0] sm:$0xff]
    %v215 = vld [vmem:[%s3 + $0x1b8] sm:$0xff]
    %v216 = vld [vmem:[%s3 + $0x1c0] sm:$0xff]
    %v217 = vld [vmem:[%s3 + $0x1c8] sm:$0xff]
    %v218 = vld [vmem:[%s3 + $0x1d0] sm:$0xff]
    %v219 = vld [vmem:[%s3 + $0x1d8] sm:$0xff]
    %v220 = vld [vmem:[%s3 + $0x1e0] sm:$0xff]
    %v221 = vld [vmem:[%s3 + $0x1e8] sm:$0xff]
    %v222 = vld [vmem:[%s3 + $0x1f0] sm:$0xff]
    %v223 = vld [vmem:[%s3 + $0x1f8] sm:$0xff]
    %v224 = vld [vmem:[#allocation2] sm:$0x1]
    %v226 = vperm.slane %v224, 0
    %228 = vmatpush.msra.mxu0 %v175
    %229 = vmatpush.msra.mxu0 %v174
    %230 = vmatpush.msra.mxu0 %v173
    %231 = vmatpush.msra.mxu0 %v172
    %232 = vmatpush.msra.mxu0 %v171
    %233 = vmatpush.msra.mxu0 %v170
    %234 = vmatpush.msra.mxu0 %v169
    %235 = vmatpush.msra.mxu0 %v168
    %236 = vmatpush.msra.mxu0 %v167
    %237 = vmatpush.msra.mxu0 %v166
    %238 = vmatpush.msra.mxu0 %v165
    %239 = vmatpush.msra.mxu0 %v164
    %240 = vmatpush.msra.mxu0 %v163
    %241 = vmatpush.msra.mxu0 %v162
    %242 = vmatpush.msra.mxu0 %v161
    %243 = vmatpush.msra.mxu0 %v160
    %244 = vmatmul.f32.gmra.mxu0 %v141
    %v245 = vpop.f32.mrf.mxu0
    %v246 = vadd.f32 %v226, %v245
    %247 = vdwg.mxu0
    %248 = vmatpush.msra.mxu0 %v191
    %249 = vmatpush.msra.mxu0 %v190
    %250 = vmatpush.msra.mxu0 %v189
    %251 = vmatpush.msra.mxu0 %v188
    %252 = vmatpush.msra.mxu0 %v187
    %253 = vmatpush.msra.mxu0 %v186
    %254 = vmatpush.msra.mxu0 %v185
    %255 = vmatpush.msra.mxu0 %v184
    %256 = vmatpush.msra.mxu0 %v183
    %257 = vmatpush.msra.mxu0 %v182
    %258 = vmatpush.msra.mxu0 %v181
    %259 = vmatpush.msra.mxu0 %v180
    %260 = vmatpush.msra.mxu0 %v179
    %261 = vmatpush.msra.mxu0 %v178
    %262 = vmatpush.msra.mxu0 %v177
    %263 = vmatpush.msra.mxu0 %v176
    %264 = vmatmul.f32.gmra.mxu0 %v142
    %v265 = vpop.f32.mrf.mxu0
    %v266 = vadd.f32 %v246, %v265
    %267 = vdwg.mxu0
    %268 = vmatpush.msra.mxu0 %v207
    %269 = vmatpush.msra.mxu0 %v206
    %270 = vmatpush.msra.mxu0 %v205
    %271 = vmatpush.msra.mxu0 %v204
    %272 = vmatpush.msra.mxu0 %v203
    %273 = vmatpush.msra.mxu0 %v202
    %274 = vmatpush.msra.mxu0 %v201
    %275 = vmatpush.msra.mxu0 %v200
    %276 = vmatpush.msra.mxu0 %v199
    %277 = vmatpush.msra.mxu0 %v198
    %278 = vmatpush.msra.mxu0 %v197
    %279 = vmatpush.msra.mxu0 %v196
    %280 = vmatpush.msra.mxu0 %v195
    %281 = vmatpush.msra.mxu0 %v194
    %282 = vmatpush.msra.mxu0 %v193
    %283 = vmatpush.msra.mxu0 %v192
    %284 = vmatmul.f32.gmra.mxu0 %v143
    %v285 = vpop.f32.mrf.mxu0
    %v286 = vadd.f32 %v266, %v285
    %287 = vdwg.mxu0
    %288 = vmatpush.msra.mxu0 %v223
    %289 = vmatpush.msra.mxu0 %v222
    %290 = vmatpush.msra.mxu0 %v221
    %291 = vmatpush.msra.mxu0 %v220
    %292 = vmatpush.msra.mxu0 %v219
    %293 = vmatpush.msra.mxu0 %v218
    %294 = vmatpush.msra.mxu0 %v217
    %295 = vmatpush.msra.mxu0 %v216
    %296 = vmatpush.msra.mxu0 %v215
    %297 = vmatpush.msra.mxu0 %v214
    %298 = vmatpush.msra.mxu0 %v213
    %299 = vmatpush.msra.mxu0 %v212
    %300 = vmatpush.msra.mxu0 %v211
    %301 = vmatpush.msra.mxu0 %v210
    %302 = vmatpush.msra.mxu0 %v209
    %303 = vmatpush.msra.mxu0 %v208
    %304 = vmatmul.f32.gmra.mxu0 %v144
    %v305 = vpop.f32.mrf.mxu0
    %v306 = vadd.f32 %v286, %v305
    %307 = vdwg.mxu0
    %vm308 = vcmask 1024
    %309 = vst.msk [vmem:[%s6] sm:$0x3] %vm308, %v306
    // Predicated region
    $region22: #{actor_critic_base_forward.7} parent=1 // pred_check
      _
    $region23: #{actor_critic_base_forward.7} parent=1 // pred_check_branch
      %311 = sbr.rel (0) target = $region25
    $region24: #{actor_critic_base_forward.7} parent=1 // pred_region
      %313 = vsyncadd [#allocation4], 0
      %s315 = sshll.u32 [#allocation3], 4
      %s316 = int_to_ptr.vmem [resolvable:$true] %s315
      %s317 = sshll.u32 %s5, 4
      %s318 = int_to_ptr.hbm [resolvable:$true] %s317
      %320 = dma.vmem_to_hbm [thread:$0]  %s316, 128, %s318, [#allocation4]
    $region25: #{actor_critic_base_forward.7} parent=1 // pred_fallthru
      _
    // Predicated region
    $region26: #{actor_critic_base_forward.7} parent=1 // pred_check
      _
    $region27: #{actor_critic_base_forward.7} parent=1 // pred_check_branch
      %322 = sbr.rel (0) target = $region29
    $region28: #{actor_critic_base_forward.7} parent=1 // pred_region
      _
    $region29: #{actor_critic_base_forward.7} parent=1 // pred_fallthru
      _
    // Predicated region
    $region30: #{actor_critic_base_forward.7} parent=1 // pred_check
      _
    $region31: #{actor_critic_base_forward.7} parent=1 // pred_check_branch
      %324 = sbr.rel (0) target = $region33
    $region32: #{actor_critic_base_forward.7} parent=1 // pred_region
      %326 = dma.done [#allocation4], 128
    $region33: #{actor_critic_base_forward.7} parent=1 // pred_fallthru
      _
    // Predicated region
    $region34: #{actor_critic_base_forward.7} parent=1 // pred_check
      _
    $region35: #{actor_critic_base_forward.7} parent=1 // pred_check_branch
      %328 = sbr.rel (0) target = $region37
    $region36: #{actor_critic_base_forward.7} parent=1 // pred_region
      _
    $region37: #{actor_critic_base_forward.7} parent=1 // pred_fallthru
      _
    %329 = vsyncpa [#allocation4], 1

</llo_original>
